<compile_context>
chip_gen: v6e
topology: v6e:2x2x1
jax: 0.10.0
libtpu: 0.0.40
codegen_flags: <defaults>
</compile_context>

<pallas_src>
import numpy as np
import jax
import jax.numpy as jnp
from jax import lax
from jax.experimental import pallas as pl
from jax.experimental.pallas import tpu as pltpu

INPUT_SIZE = 13
HIDDEN = 13
GATE = 64            # lane slab per gate (kernel slab order: i, f, o, g)
NGATES = 4
GW = NGATES * GATE   # 256 gate lanes total
KPAD = 16            # sublane-padded K (rows) of W_hh; rows >= 13 are zero


def _lstm_kernel(x_ref, w_ih_ref, w_hh_ref, b_ref, w_fc_ref, b_fc_ref,
                 out_ref, xg_ref):
    """Whole LSTM + fc1 + sigmoid, VMEM-resident, single invocation.

    x_ref    : (T*B, D)   input, time-major row order (t*B + b)
    w_ih_ref : (D, GW)    weight_ih.T, slab s holds lanes [s*64, s*64+13), rest 0
    w_hh_ref : (KPAD, GW) weight_hh.T, rows >= 13 zero, same lane padding
    b_ref    : (1, GW)    bias_ih + bias_hh, lane-padded with zeros
    w_fc_ref : (1, GATE)  fc1.weight, lanes >= 13 zero
    b_fc_ref : (1,) SMEM  fc1.bias scalar
    out_ref  : (B, T)     sigmoid(fc1(h_t))  (reshaped to (B,T,1) in wrapper)
    xg_ref   : (T*B, GW)  VMEM scratch: staged input projection
    """
    B, T = out_ref.shape
    TB, D = x_ref.shape
    G = GATE

    # ---- Hoisted input projection: one matmul for all timesteps, bias fused.
    xg_ref[...] = (jnp.dot(x_ref[...], w_ih_ref[...],
                           preferred_element_type=jnp.float32)
                   + b_ref[...])                               # (T*B, GW)

    w_hh = w_hh_ref[...]     # (16, 256) f32 = 4 vregs: safe to keep live
    w_fc = w_fc_ref[...]     # (1, GATE)

    h = jnp.zeros((B, G), jnp.float32)
    c = jnp.zeros((B, G), jnp.float32)

    t_iota = lax.broadcasted_iota(jnp.int32, (B, T), 1)
    logit = jnp.zeros((B, T), jnp.float32)

    # ---- Fully unrolled recurrence (T static).  Only the (B,16)@(16,256)
    # dot + the elementwise update sit on the serial h->h chain.
    # Padding lanes 13:64: gates there are 0 -> sigmoid=0.5 / tanh=0, so
    # c_pad stays 0 and h_pad = 0.5*tanh(0) = 0 for all steps.
    for t in range(T):
        xg_t = xg_ref[pl.ds(t * B, B), :]                      # clean row load
        gates = xg_t + jnp.dot(h[:, :KPAD], w_hh,
                               preferred_element_type=jnp.float32)  # (B, GW)
        sig = jax.nn.sigmoid(gates)        # i/f/o slabs used; g slab ignored
        i_g = sig[:, 0 * G:1 * G]
        f_g = sig[:, 1 * G:2 * G]
        o_g = sig[:, 2 * G:3 * G]
        g_g = jnp.tanh(gates[:, 3 * G:4 * G])
        c = f_g * c + i_g * g_g
        h = o_g * jnp.tanh(c)
        # fc1 contribution for this step (off the h->h chain): lane reduce.
        logit_t = jnp.sum(h * w_fc, axis=-1, keepdims=True)    # (B, 1)
        logit = jnp.where(t_iota == t, logit_t, logit)         # (B, T)

    # ---- Single sigmoid + single store.
    out_ref[...] = jax.nn.sigmoid(logit + b_fc_ref[0]).astype(out_ref.dtype)


def prepare_params(w_ih, w_hh, b_ih, b_hh, w_fc, b_fc):
    """Host-side (run once): lane-aligned zero-padded params, slab order i,f,o,g."""
    H, D, G = HIDDEN, INPUT_SIZE, GATE
    w_ih_np = np.asarray(w_ih, np.float32)                 # (4H, D) torch order i,f,g,o
    w_hh_np = np.asarray(w_hh, np.float32)                 # (4H, H)
    b_np = np.asarray(b_ih, np.float32) + np.asarray(b_hh, np.float32)
    w_fc_np = np.asarray(w_fc, np.float32).reshape(H)
    b_fc_np = np.asarray(b_fc, np.float32).reshape(1)

    torch_gate_for_slab = (0, 1, 3, 2)                      # slabs: i, f, o, g

    w_ih_pad = np.zeros((D, GW), np.float32)
    w_hh_pad = np.zeros((KPAD, GW), np.float32)
    b_pad = np.zeros((1, GW), np.float32)
    for s, tg in enumerate(torch_gate_for_slab):
        w_ih_pad[:, s * G:s * G + H] = w_ih_np[tg * H:(tg + 1) * H, :].T
        w_hh_pad[:H, s * G:s * G + H] = w_hh_np[tg * H:(tg + 1) * H, :].T
        b_pad[0, s * G:s * G + H] = b_np[tg * H:(tg + 1) * H]
    w_fc_pad = np.zeros((1, G), np.float32)
    w_fc_pad[0, :H] = w_fc_np

    return (jnp.asarray(w_ih_pad), jnp.asarray(w_hh_pad), jnp.asarray(b_pad),
            jnp.asarray(w_fc_pad), jnp.asarray(b_fc_np))


@jax.jit
def lstm_network_forward(x, w_ih_pad, w_hh_pad, b_pad, w_fc_pad, b_fc_1):
    """x: (B, T, 13) float32 -> (B, T, 1) float32 (matches the PyTorch module)."""
    B, T, D = x.shape
    assert D == INPUT_SIZE
    # Tiny time-major flatten so the kernel's per-step rows are contiguous.
    x_tb = jnp.transpose(x.astype(jnp.float32), (1, 0, 2)).reshape(T * B, D)

    out = pl.pallas_call(
        _lstm_kernel,
        out_shape=jax.ShapeDtypeStruct((B, T), jnp.float32),
        in_specs=[
            pl.BlockSpec(memory_space=pltpu.MemorySpace.VMEM),   # x (T*B, D)
            pl.BlockSpec(memory_space=pltpu.MemorySpace.VMEM),   # w_ih_pad
            pl.BlockSpec(memory_space=pltpu.MemorySpace.VMEM),   # w_hh_pad
            pl.BlockSpec(memory_space=pltpu.MemorySpace.VMEM),   # b_pad
            pl.BlockSpec(memory_space=pltpu.MemorySpace.VMEM),   # w_fc_pad
            pl.BlockSpec(memory_space=pltpu.MemorySpace.SMEM),   # b_fc scalar
        ],
        out_specs=pl.BlockSpec(memory_space=pltpu.MemorySpace.VMEM),
        scratch_shapes=[pltpu.VMEM((T * B, GW), jnp.float32)],
    )(x_tb, w_ih_pad, w_hh_pad, b_pad, w_fc_pad, b_fc_1)
    return out[..., None]                                        # (B, T, 1)


def lstm_network_reference(x, w_ih, w_hh, b_ih, b_hh, w_fc, b_fc):
    """Plain-JAX reference mirroring torch.nn.LSTM semantics (gate order i,f,g,o)."""
    B, T, D = x.shape
    H = HIDDEN

    def cell(carry, x_t):
        h, c = carry
        gates = x_t @ w_ih.T + b_ih + h @ w_hh.T + b_hh
        i_g = jax.nn.sigmoid(gates[:, 0 * H:1 * H])
        f_g = jax.nn.sigmoid(gates[:, 1 * H:2 * H])
        g_g = jnp.tanh(gates[:, 2 * H:3 * H])
        o_g = jax.nn.sigmoid(gates[:, 3 * H:4 * H])
        c = f_g * c + i_g * g_g
        h = o_g * jnp.tanh(c)
        return (h, c), h

    init = (jnp.zeros((B, H), jnp.float32), jnp.zeros((B, H), jnp.float32))
    _, hs = lax.scan(cell, init, jnp.transpose(x, (1, 0, 2)))
    hs = jnp.transpose(hs, (1, 0, 2))                            # (B, T, H)
    return jax.nn.sigmoid(hs @ w_fc.T + b_fc)                    # (B, T, 1)


if __name__ == "__main__":
    B, T = 2, 8
    D, H = INPUT_SIZE, HIDDEN

    key = jax.random.PRNGKey(0)
    kx, k0, k1, k2, k3, k4, k5 = jax.random.split(key, 7)
    bound = 1.0 / float(H) ** 0.5   # PyTorch default uniform(-1/sqrt(H), 1/sqrt(H))

    x = jax.random.normal(kx, (B, T, D), jnp.float32)
    w_ih = jax.random.uniform(k0, (4 * H, D), jnp.float32, -bound, bound)
    w_hh = jax.random.uniform(k1, (4 * H, H), jnp.float32, -bound, bound)
    b_ih = jax.random.uniform(k2, (4 * H,), jnp.float32, -bound, bound)
    b_hh = jax.random.uniform(k3, (4 * H,), jnp.float32, -bound, bound)
    w_fc = jax.random.uniform(k4, (1, H), jnp.float32, -bound, bound)
    b_fc = jax.random.uniform(k5, (1,), jnp.float32, -bound, bound)

    # Padded weights are built once, outside the jitted forward.
    params = prepare_params(w_ih, w_hh, b_ih, b_hh, w_fc, b_fc)

    out = lstm_network_forward(x, *params)
    out = jax.block_until_ready(out)

    ref = lstm_network_reference(x, w_ih, w_hh, b_ih, b_hh, w_fc, b_fc)
    assert out.shape == (B, T, 1), out.shape
    assert jnp.allclose(out, ref, atol=2e-5, rtol=1e-5), (
        f"max abs err {float(jnp.max(jnp.abs(out - ref)))}")

    print("KERNEL_OK")
</pallas_src>

<mosaic_0001>
module attributes {stable_mosaic.version = 11 : i64} {
  func.func @_lstm_kernel(%arg0: memref<16x13xf32, #tpu.memory_space<vmem>>, %arg1: memref<13x256xf32, #tpu.memory_space<vmem>>, %arg2: memref<16x256xf32, #tpu.memory_space<vmem>>, %arg3: memref<1x256xf32, #tpu.memory_space<vmem>>, %arg4: memref<1x64xf32, #tpu.memory_space<vmem>>, %arg5: memref<1xf32, #tpu.memory_space<smem>>, %arg6: memref<2x8xf32, #tpu.memory_space<vmem>>, %arg7: memref<16x256xf32, #tpu.memory_space<vmem>>) attributes {dimension_semantics = [], scalar_prefetch = 0 : i64, scratch_operands = 1 : i64, tpu.core_type = #tpu.core_type<tc>} {
    %c0 = arith.constant 0 : index
    %c0_0 = arith.constant 0 : index
    %0 = vector.load %arg0[%c0, %c0_0] : memref<16x13xf32, #tpu.memory_space<vmem>>, vector<16x13xf32>
    %c0_1 = arith.constant 0 : index
    %c0_2 = arith.constant 0 : index
    %1 = vector.load %arg1[%c0_1, %c0_2] : memref<13x256xf32, #tpu.memory_space<vmem>>, vector<13x256xf32>
    %cst = arith.constant dense<0.000000e+00> : vector<16x256xf32>
    %2 = tpu.matmul %0, %1, %cst {dimension_numbers = #tpu.dot_dimension_numbers<[1], [0], [0], [1], [0, 0, 1, 1], [], []>} : vector<16x13xf32>, vector<13x256xf32>, vector<16x256xf32> -> vector<16x256xf32>
    %c0_3 = arith.constant 0 : index
    %c0_4 = arith.constant 0 : index
    %3 = vector.load %arg3[%c0_3, %c0_4] : memref<1x256xf32, #tpu.memory_space<vmem>>, vector<1x256xf32>
    %4 = vector.broadcast %3 : vector<1x256xf32> to vector<16x256xf32>
    %5 = arith.addf %2, %4 : vector<16x256xf32>
    %c0_5 = arith.constant 0 : index
    %c0_6 = arith.constant 0 : index
    %6 = vector.load %arg7[%c0_5, %c0_6] : memref<16x256xf32, #tpu.memory_space<vmem>>, vector<16x256xf32>
    tpu.vector_store %arg7[%c0_5, %c0_6], %5 {strides = array<i32>} : memref<16x256xf32, #tpu.memory_space<vmem>>, vector<16x256xf32>,
    %c0_7 = arith.constant 0 : index
    %c0_8 = arith.constant 0 : index
    %7 = vector.load %arg2[%c0_7, %c0_8] : memref<16x256xf32, #tpu.memory_space<vmem>>, vector<16x256xf32>
    %c0_9 = arith.constant 0 : index
    %c0_10 = arith.constant 0 : index
    %8 = vector.load %arg4[%c0_9, %c0_10] : memref<1x64xf32, #tpu.memory_space<vmem>>, vector<1x64xf32>
    %cst_11 = arith.constant 0.000000e+00 : f32
    %9 = vector.broadcast %cst_11 : f32 to vector<2x64xf32>
    %cst_12 = arith.constant 0.000000e+00 : f32
    %10 = vector.broadcast %cst_12 : f32 to vector<2x64xf32>
    %11 = tpu.iota {dimensions = array<i32: 1>} : vector<2x8xi32>
    %cst_13 = arith.constant 0.000000e+00 : f32
    %12 = vector.broadcast %cst_13 : f32 to vector<2x8xf32>
    %c0_14 = arith.constant 0 : index
    %c0_15 = arith.constant 0 : index
    %13 = vector.load %arg7[%c0_14, %c0_15] : memref<16x256xf32, #tpu.memory_space<vmem>>, vector<2x256xf32>
    %14 = vector.extract_strided_slice %9 {offsets = [0, 0], sizes = [2, 16], strides = [1, 1]} : vector<2x64xf32> to vector<2x16xf32>
    %cst_16 = arith.constant dense<0.000000e+00> : vector<2x256xf32>
    %15 = tpu.matmul %14, %7, %cst_16 {dimension_numbers = #tpu.dot_dimension_numbers<[1], [0], [0], [1], [0, 0, 1, 1], [], []>} : vector<2x16xf32>, vector<16x256xf32>, vector<2x256xf32> -> vector<2x256xf32>
    %16 = arith.addf %13, %15 : vector<2x256xf32>
    %17 = arith.negf %16 : vector<2x256xf32>
    %18 = math.exp %17 : vector<2x256xf32>
    %cst_17 = arith.constant 1.000000e+00 : f32
    %19 = vector.broadcast %cst_17 : f32 to vector<2x256xf32>
    %20 = arith.addf %19, %18 : vector<2x256xf32>
    %21 = arith.divf %19, %20 : vector<2x256xf32>
    %22 = vector.extract_strided_slice %21 {offsets = [0, 0], sizes = [2, 64], strides = [1, 1]} : vector<2x256xf32> to vector<2x64xf32>
    %23 = vector.extract_strided_slice %21 {offsets = [0, 64], sizes = [2, 64], strides = [1, 1]} : vector<2x256xf32> to vector<2x64xf32>
    %24 = vector.extract_strided_slice %21 {offsets = [0, 128], sizes = [2, 64], strides = [1, 1]} : vector<2x256xf32> to vector<2x64xf32>
    %25 = vector.extract_strided_slice %16 {offsets = [0, 192], sizes = [2, 64], strides = [1, 1]} : vector<2x256xf32> to vector<2x64xf32>
    %26 = math.tanh %25 : vector<2x64xf32>
    %27 = arith.mulf %23, %10 : vector<2x64xf32>
    %28 = arith.mulf %22, %26 : vector<2x64xf32>
    %29 = arith.addf %27, %28 : vector<2x64xf32>
    %30 = math.tanh %29 : vector<2x64xf32>
    %31 = arith.mulf %24, %30 : vector<2x64xf32>
    %32 = vector.broadcast %8 : vector<1x64xf32> to vector<2x64xf32>
    %33 = arith.mulf %31, %32 : vector<2x64xf32>
    %cst_18 = arith.constant dense<0.000000e+00> : vector<2xf32>
    %34 = vector.multi_reduction <add>, %33, %cst_18 [1] : vector<2x64xf32> to vector<2xf32>
    %35 = vector.shape_cast %34 : vector<2xf32> to vector<2x1xf32>
    %c0_i32 = arith.constant 0 : i32
    %36 = vector.broadcast %c0_i32 : i32 to vector<2x8xi32>
    %37 = arith.cmpi eq, %11, %36 : vector<2x8xi32>
    %38 = vector.shape_cast %35 : vector<2x1xf32> to vector<2x1xf32>
    %39 = vector.broadcast %38 : vector<2x1xf32> to vector<2x8xf32>
    %40 = arith.select %37, %39, %12 : vector<2x8xi1>, vector<2x8xf32>
    %c2 = arith.constant 2 : index
    %c0_19 = arith.constant 0 : index
    %41 = vector.load %arg7[%c2, %c0_19] : memref<16x256xf32, #tpu.memory_space<vmem>>, vector<2x256xf32>
    %42 = vector.extract_strided_slice %31 {offsets = [0, 0], sizes = [2, 16], strides = [1, 1]} : vector<2x64xf32> to vector<2x16xf32>
    %cst_20 = arith.constant dense<0.000000e+00> : vector<2x256xf32>
    %43 = tpu.matmul %42, %7, %cst_20 {dimension_numbers = #tpu.dot_dimension_numbers<[1], [0], [0], [1], [0, 0, 1, 1], [], []>} : vector<2x16xf32>, vector<16x256xf32>, vector<2x256xf32> -> vector<2x256xf32>
    %44 = arith.addf %41, %43 : vector<2x256xf32>
    %45 = arith.negf %44 : vector<2x256xf32>
    %46 = math.exp %45 : vector<2x256xf32>
    %cst_21 = arith.constant 1.000000e+00 : f32
    %47 = vector.broadcast %cst_21 : f32 to vector<2x256xf32>
    %48 = arith.addf %47, %46 : vector<2x256xf32>
    %49 = arith.divf %47, %48 : vector<2x256xf32>
    %50 = vector.extract_strided_slice %49 {offsets = [0, 0], sizes = [2, 64], strides = [1, 1]} : vector<2x256xf32> to vector<2x64xf32>
    %51 = vector.extract_strided_slice %49 {offsets = [0, 64], sizes = [2, 64], strides = [1, 1]} : vector<2x256xf32> to vector<2x64xf32>
    %52 = vector.extract_strided_slice %49 {offsets = [0, 128], sizes = [2, 64], strides = [1, 1]} : vector<2x256xf32> to vector<2x64xf32>
    %53 = vector.extract_strided_slice %44 {offsets = [0, 192], sizes = [2, 64], strides = [1, 1]} : vector<2x256xf32> to vector<2x64xf32>
    %54 = math.tanh %53 : vector<2x64xf32>
    %55 = arith.mulf %51, %29 : vector<2x64xf32>
    %56 = arith.mulf %50, %54 : vector<2x64xf32>
    %57 = arith.addf %55, %56 : vector<2x64xf32>
    %58 = math.tanh %57 : vector<2x64xf32>
    %59 = arith.mulf %52, %58 : vector<2x64xf32>
    %60 = vector.broadcast %8 : vector<1x64xf32> to vector<2x64xf32>
    %61 = arith.mulf %59, %60 : vector<2x64xf32>
    %cst_22 = arith.constant dense<0.000000e+00> : vector<2xf32>
    %62 = vector.multi_reduction <add>, %61, %cst_22 [1] : vector<2x64xf32> to vector<2xf32>
    %63 = vector.shape_cast %62 : vector<2xf32> to vector<2x1xf32>
    %c1_i32 = arith.constant 1 : i32
    %64 = vector.broadcast %c1_i32 : i32 to vector<2x8xi32>
    %65 = arith.cmpi eq, %11, %64 : vector<2x8xi32>
    %66 = vector.shape_cast %63 : vector<2x1xf32> to vector<2x1xf32>
    %67 = vector.broadcast %66 : vector<2x1xf32> to vector<2x8xf32>
    %68 = arith.select %65, %67, %40 : vector<2x8xi1>, vector<2x8xf32>
    %c4 = arith.constant 4 : index
    %c0_23 = arith.constant 0 : index
    %69 = vector.load %arg7[%c4, %c0_23] : memref<16x256xf32, #tpu.memory_space<vmem>>, vector<2x256xf32>
    %70 = vector.extract_strided_slice %59 {offsets = [0, 0], sizes = [2, 16], strides = [1, 1]} : vector<2x64xf32> to vector<2x16xf32>
    %cst_24 = arith.constant dense<0.000000e+00> : vector<2x256xf32>
    %71 = tpu.matmul %70, %7, %cst_24 {dimension_numbers = #tpu.dot_dimension_numbers<[1], [0], [0], [1], [0, 0, 1, 1], [], []>} : vector<2x16xf32>, vector<16x256xf32>, vector<2x256xf32> -> vector<2x256xf32>
    %72 = arith.addf %69, %71 : vector<2x256xf32>
    %73 = arith.negf %72 : vector<2x256xf32>
    %74 = math.exp %73 : vector<2x256xf32>
    %cst_25 = arith.constant 1.000000e+00 : f32
    %75 = vector.broadcast %cst_25 : f32 to vector<2x256xf32>
    %76 = arith.addf %75, %74 : vector<2x256xf32>
    %77 = arith.divf %75, %76 : vector<2x256xf32>
    %78 = vector.extract_strided_slice %77 {offsets = [0, 0], sizes = [2, 64], strides = [1, 1]} : vector<2x256xf32> to vector<2x64xf32>
    %79 = vector.extract_strided_slice %77 {offsets = [0, 64], sizes = [2, 64], strides = [1, 1]} : vector<2x256xf32> to vector<2x64xf32>
    %80 = vector.extract_strided_slice %77 {offsets = [0, 128], sizes = [2, 64], strides = [1, 1]} : vector<2x256xf32> to vector<2x64xf32>
    %81 = vector.extract_strided_slice %72 {offsets = [0, 192], sizes = [2, 64], strides = [1, 1]} : vector<2x256xf32> to vector<2x64xf32>
    %82 = math.tanh %81 : vector<2x64xf32>
    %83 = arith.mulf %79, %57 : vector<2x64xf32>
    %84 = arith.mulf %78, %82 : vector<2x64xf32>
    %85 = arith.addf %83, %84 : vector<2x64xf32>
    %86 = math.tanh %85 : vector<2x64xf32>
    %87 = arith.mulf %80, %86 : vector<2x64xf32>
    %88 = vector.broadcast %8 : vector<1x64xf32> to vector<2x64xf32>
    %89 = arith.mulf %87, %88 : vector<2x64xf32>
    %cst_26 = arith.constant dense<0.000000e+00> : vector<2xf32>
    %90 = vector.multi_reduction <add>, %89, %cst_26 [1] : vector<2x64xf32> to vector<2xf32>
    %91 = vector.shape_cast %90 : vector<2xf32> to vector<2x1xf32>
    %c2_i32 = arith.constant 2 : i32
    %92 = vector.broadcast %c2_i32 : i32 to vector<2x8xi32>
    %93 = arith.cmpi eq, %11, %92 : vector<2x8xi32>
    %94 = vector.shape_cast %91 : vector<2x1xf32> to vector<2x1xf32>
    %95 = vector.broadcast %94 : vector<2x1xf32> to vector<2x8xf32>
    %96 = arith.select %93, %95, %68 : vector<2x8xi1>, vector<2x8xf32>
    %c6 = arith.constant 6 : index
    %c0_27 = arith.constant 0 : index
    %97 = vector.load %arg7[%c6, %c0_27] : memref<16x256xf32, #tpu.memory_space<vmem>>, vector<2x256xf32>
    %98 = vector.extract_strided_slice %87 {offsets = [0, 0], sizes = [2, 16], strides = [1, 1]} : vector<2x64xf32> to vector<2x16xf32>
    %cst_28 = arith.constant dense<0.000000e+00> : vector<2x256xf32>
    %99 = tpu.matmul %98, %7, %cst_28 {dimension_numbers = #tpu.dot_dimension_numbers<[1], [0], [0], [1], [0, 0, 1, 1], [], []>} : vector<2x16xf32>, vector<16x256xf32>, vector<2x256xf32> -> vector<2x256xf32>
    %100 = arith.addf %97, %99 : vector<2x256xf32>
    %101 = arith.negf %100 : vector<2x256xf32>
    %102 = math.exp %101 : vector<2x256xf32>
    %cst_29 = arith.constant 1.000000e+00 : f32
    %103 = vector.broadcast %cst_29 : f32 to vector<2x256xf32>
    %104 = arith.addf %103, %102 : vector<2x256xf32>
    %105 = arith.divf %103, %104 : vector<2x256xf32>
    %106 = vector.extract_strided_slice %105 {offsets = [0, 0], sizes = [2, 64], strides = [1, 1]} : vector<2x256xf32> to vector<2x64xf32>
    %107 = vector.extract_strided_slice %105 {offsets = [0, 64], sizes = [2, 64], strides = [1, 1]} : vector<2x256xf32> to vector<2x64xf32>
    %108 = vector.extract_strided_slice %105 {offsets = [0, 128], sizes = [2, 64], strides = [1, 1]} : vector<2x256xf32> to vector<2x64xf32>
    %109 = vector.extract_strided_slice %100 {offsets = [0, 192], sizes = [2, 64], strides = [1, 1]} : vector<2x256xf32> to vector<2x64xf32>
    %110 = math.tanh %109 : vector<2x64xf32>
    %111 = arith.mulf %107, %85 : vector<2x64xf32>
    %112 = arith.mulf %106, %110 : vector<2x64xf32>
    %113 = arith.addf %111, %112 : vector<2x64xf32>
    %114 = math.tanh %113 : vector<2x64xf32>
    %115 = arith.mulf %108, %114 : vector<2x64xf32>
    %116 = vector.broadcast %8 : vector<1x64xf32> to vector<2x64xf32>
    %117 = arith.mulf %115, %116 : vector<2x64xf32>
    %cst_30 = arith.constant dense<0.000000e+00> : vector<2xf32>
    %118 = vector.multi_reduction <add>, %117, %cst_30 [1] : vector<2x64xf32> to vector<2xf32>
    %119 = vector.shape_cast %118 : vector<2xf32> to vector<2x1xf32>
    %c3_i32 = arith.constant 3 : i32
    %120 = vector.broadcast %c3_i32 : i32 to vector<2x8xi32>
    %121 = arith.cmpi eq, %11, %120 : vector<2x8xi32>
    %122 = vector.shape_cast %119 : vector<2x1xf32> to vector<2x1xf32>
    %123 = vector.broadcast %122 : vector<2x1xf32> to vector<2x8xf32>
    %124 = arith.select %121, %123, %96 : vector<2x8xi1>, vector<2x8xf32>
    %c8 = arith.constant 8 : index
    %c0_31 = arith.constant 0 : index
    %125 = vector.load %arg7[%c8, %c0_31] : memref<16x256xf32, #tpu.memory_space<vmem>>, vector<2x256xf32>
    %126 = vector.extract_strided_slice %115 {offsets = [0, 0], sizes = [2, 16], strides = [1, 1]} : vector<2x64xf32> to vector<2x16xf32>
    %cst_32 = arith.constant dense<0.000000e+00> : vector<2x256xf32>
    %127 = tpu.matmul %126, %7, %cst_32 {dimension_numbers = #tpu.dot_dimension_numbers<[1], [0], [0], [1], [0, 0, 1, 1], [], []>} : vector<2x16xf32>, vector<16x256xf32>, vector<2x256xf32> -> vector<2x256xf32>
    %128 = arith.addf %125, %127 : vector<2x256xf32>
    %129 = arith.negf %128 : vector<2x256xf32>
    %130 = math.exp %129 : vector<2x256xf32>
    %cst_33 = arith.constant 1.000000e+00 : f32
    %131 = vector.broadcast %cst_33 : f32 to vector<2x256xf32>
    %132 = arith.addf %131, %130 : vector<2x256xf32>
    %133 = arith.divf %131, %132 : vector<2x256xf32>
    %134 = vector.extract_strided_slice %133 {offsets = [0, 0], sizes = [2, 64], strides = [1, 1]} : vector<2x256xf32> to vector<2x64xf32>
    %135 = vector.extract_strided_slice %133 {offsets = [0, 64], sizes = [2, 64], strides = [1, 1]} : vector<2x256xf32> to vector<2x64xf32>
    %136 = vector.extract_strided_slice %133 {offsets = [0, 128], sizes = [2, 64], strides = [1, 1]} : vector<2x256xf32> to vector<2x64xf32>
    %137 = vector.extract_strided_slice %128 {offsets = [0, 192], sizes = [2, 64], strides = [1, 1]} : vector<2x256xf32> to vector<2x64xf32>
    %138 = math.tanh %137 : vector<2x64xf32>
    %139 = arith.mulf %135, %113 : vector<2x64xf32>
    %140 = arith.mulf %134, %138 : vector<2x64xf32>
    %141 = arith.addf %139, %140 : vector<2x64xf32>
    %142 = math.tanh %141 : vector<2x64xf32>
    %143 = arith.mulf %136, %142 : vector<2x64xf32>
    %144 = vector.broadcast %8 : vector<1x64xf32> to vector<2x64xf32>
    %145 = arith.mulf %143, %144 : vector<2x64xf32>
    %cst_34 = arith.constant dense<0.000000e+00> : vector<2xf32>
    %146 = vector.multi_reduction <add>, %145, %cst_34 [1] : vector<2x64xf32> to vector<2xf32>
    %147 = vector.shape_cast %146 : vector<2xf32> to vector<2x1xf32>
    %c4_i32 = arith.constant 4 : i32
    %148 = vector.broadcast %c4_i32 : i32 to vector<2x8xi32>
    %149 = arith.cmpi eq, %11, %148 : vector<2x8xi32>
    %150 = vector.shape_cast %147 : vector<2x1xf32> to vector<2x1xf32>
    %151 = vector.broadcast %150 : vector<2x1xf32> to vector<2x8xf32>
    %152 = arith.select %149, %151, %124 : vector<2x8xi1>, vector<2x8xf32>
    %c10 = arith.constant 10 : index
    %c0_35 = arith.constant 0 : index
    %153 = vector.load %arg7[%c10, %c0_35] : memref<16x256xf32, #tpu.memory_space<vmem>>, vector<2x256xf32>
    %154 = vector.extract_strided_slice %143 {offsets = [0, 0], sizes = [2, 16], strides = [1, 1]} : vector<2x64xf32> to vector<2x16xf32>
    %cst_36 = arith.constant dense<0.000000e+00> : vector<2x256xf32>
    %155 = tpu.matmul %154, %7, %cst_36 {dimension_numbers = #tpu.dot_dimension_numbers<[1], [0], [0], [1], [0, 0, 1, 1], [], []>} : vector<2x16xf32>, vector<16x256xf32>, vector<2x256xf32> -> vector<2x256xf32>
    %156 = arith.addf %153, %155 : vector<2x256xf32>
    %157 = arith.negf %156 : vector<2x256xf32>
    %158 = math.exp %157 : vector<2x256xf32>
    %cst_37 = arith.constant 1.000000e+00 : f32
    %159 = vector.broadcast %cst_37 : f32 to vector<2x256xf32>
    %160 = arith.addf %159, %158 : vector<2x256xf32>
    %161 = arith.divf %159, %160 : vector<2x256xf32>
    %162 = vector.extract_strided_slice %161 {offsets = [0, 0], sizes = [2, 64], strides = [1, 1]} : vector<2x256xf32> to vector<2x64xf32>
    %163 = vector.extract_strided_slice %161 {offsets = [0, 64], sizes = [2, 64], strides = [1, 1]} : vector<2x256xf32> to vector<2x64xf32>
    %164 = vector.extract_strided_slice %161 {offsets = [0, 128], sizes = [2, 64], strides = [1, 1]} : vector<2x256xf32> to vector<2x64xf32>
    %165 = vector.extract_strided_slice %156 {offsets = [0, 192], sizes = [2, 64], strides = [1, 1]} : vector<2x256xf32> to vector<2x64xf32>
    %166 = math.tanh %165 : vector<2x64xf32>
    %167 = arith.mulf %163, %141 : vector<2x64xf32>
    %168 = arith.mulf %162, %166 : vector<2x64xf32>
    %169 = arith.addf %167, %168 : vector<2x64xf32>
    %170 = math.tanh %169 : vector<2x64xf32>
    %171 = arith.mulf %164, %170 : vector<2x64xf32>
    %172 = vector.broadcast %8 : vector<1x64xf32> to vector<2x64xf32>
    %173 = arith.mulf %171, %172 : vector<2x64xf32>
    %cst_38 = arith.constant dense<0.000000e+00> : vector<2xf32>
    %174 = vector.multi_reduction <add>, %173, %cst_38 [1] : vector<2x64xf32> to vector<2xf32>
    %175 = vector.shape_cast %174 : vector<2xf32> to vector<2x1xf32>
    %c5_i32 = arith.constant 5 : i32
    %176 = vector.broadcast %c5_i32 : i32 to vector<2x8xi32>
    %177 = arith.cmpi eq, %11, %176 : vector<2x8xi32>
    %178 = vector.shape_cast %175 : vector<2x1xf32> to vector<2x1xf32>
    %179 = vector.broadcast %178 : vector<2x1xf32> to vector<2x8xf32>
    %180 = arith.select %177, %179, %152 : vector<2x8xi1>, vector<2x8xf32>
    %c12 = arith.constant 12 : index
    %c0_39 = arith.constant 0 : index
    %181 = vector.load %arg7[%c12, %c0_39] : memref<16x256xf32, #tpu.memory_space<vmem>>, vector<2x256xf32>
    %182 = vector.extract_strided_slice %171 {offsets = [0, 0], sizes = [2, 16], strides = [1, 1]} : vector<2x64xf32> to vector<2x16xf32>
    %cst_40 = arith.constant dense<0.000000e+00> : vector<2x256xf32>
    %183 = tpu.matmul %182, %7, %cst_40 {dimension_numbers = #tpu.dot_dimension_numbers<[1], [0], [0], [1], [0, 0, 1, 1], [], []>} : vector<2x16xf32>, vector<16x256xf32>, vector<2x256xf32> -> vector<2x256xf32>
    %184 = arith.addf %181, %183 : vector<2x256xf32>
    %185 = arith.negf %184 : vector<2x256xf32>
    %186 = math.exp %185 : vector<2x256xf32>
    %cst_41 = arith.constant 1.000000e+00 : f32
    %187 = vector.broadcast %cst_41 : f32 to vector<2x256xf32>
    %188 = arith.addf %187, %186 : vector<2x256xf32>
    %189 = arith.divf %187, %188 : vector<2x256xf32>
    %190 = vector.extract_strided_slice %189 {offsets = [0, 0], sizes = [2, 64], strides = [1, 1]} : vector<2x256xf32> to vector<2x64xf32>
    %191 = vector.extract_strided_slice %189 {offsets = [0, 64], sizes = [2, 64], strides = [1, 1]} : vector<2x256xf32> to vector<2x64xf32>
    %192 = vector.extract_strided_slice %189 {offsets = [0, 128], sizes = [2, 64], strides = [1, 1]} : vector<2x256xf32> to vector<2x64xf32>
    %193 = vector.extract_strided_slice %184 {offsets = [0, 192], sizes = [2, 64], strides = [1, 1]} : vector<2x256xf32> to vector<2x64xf32>
    %194 = math.tanh %193 : vector<2x64xf32>
    %195 = arith.mulf %191, %169 : vector<2x64xf32>
    %196 = arith.mulf %190, %194 : vector<2x64xf32>
    %197 = arith.addf %195, %196 : vector<2x64xf32>
    %198 = math.tanh %197 : vector<2x64xf32>
    %199 = arith.mulf %192, %198 : vector<2x64xf32>
    %200 = vector.broadcast %8 : vector<1x64xf32> to vector<2x64xf32>
    %201 = arith.mulf %199, %200 : vector<2x64xf32>
    %cst_42 = arith.constant dense<0.000000e+00> : vector<2xf32>
    %202 = vector.multi_reduction <add>, %201, %cst_42 [1] : vector<2x64xf32> to vector<2xf32>
    %203 = vector.shape_cast %202 : vector<2xf32> to vector<2x1xf32>
    %c6_i32 = arith.constant 6 : i32
    %204 = vector.broadcast %c6_i32 : i32 to vector<2x8xi32>
    %205 = arith.cmpi eq, %11, %204 : vector<2x8xi32>
    %206 = vector.shape_cast %203 : vector<2x1xf32> to vector<2x1xf32>
    %207 = vector.broadcast %206 : vector<2x1xf32> to vector<2x8xf32>
    %208 = arith.select %205, %207, %180 : vector<2x8xi1>, vector<2x8xf32>
    %c14 = arith.constant 14 : index
    %c0_43 = arith.constant 0 : index
    %209 = vector.load %arg7[%c14, %c0_43] : memref<16x256xf32, #tpu.memory_space<vmem>>, vector<2x256xf32>
    %210 = vector.extract_strided_slice %199 {offsets = [0, 0], sizes = [2, 16], strides = [1, 1]} : vector<2x64xf32> to vector<2x16xf32>
    %cst_44 = arith.constant dense<0.000000e+00> : vector<2x256xf32>
    %211 = tpu.matmul %210, %7, %cst_44 {dimension_numbers = #tpu.dot_dimension_numbers<[1], [0], [0], [1], [0, 0, 1, 1], [], []>} : vector<2x16xf32>, vector<16x256xf32>, vector<2x256xf32> -> vector<2x256xf32>
    %212 = arith.addf %209, %211 : vector<2x256xf32>
    %213 = arith.negf %212 : vector<2x256xf32>
    %214 = math.exp %213 : vector<2x256xf32>
    %cst_45 = arith.constant 1.000000e+00 : f32
    %215 = vector.broadcast %cst_45 : f32 to vector<2x256xf32>
    %216 = arith.addf %215, %214 : vector<2x256xf32>
    %217 = arith.divf %215, %216 : vector<2x256xf32>
    %218 = vector.extract_strided_slice %217 {offsets = [0, 0], sizes = [2, 64], strides = [1, 1]} : vector<2x256xf32> to vector<2x64xf32>
    %219 = vector.extract_strided_slice %217 {offsets = [0, 64], sizes = [2, 64], strides = [1, 1]} : vector<2x256xf32> to vector<2x64xf32>
    %220 = vector.extract_strided_slice %217 {offsets = [0, 128], sizes = [2, 64], strides = [1, 1]} : vector<2x256xf32> to vector<2x64xf32>
    %221 = vector.extract_strided_slice %212 {offsets = [0, 192], sizes = [2, 64], strides = [1, 1]} : vector<2x256xf32> to vector<2x64xf32>
    %222 = math.tanh %221 : vector<2x64xf32>
    %223 = arith.mulf %219, %197 : vector<2x64xf32>
    %224 = arith.mulf %218, %222 : vector<2x64xf32>
    %225 = arith.addf %223, %224 : vector<2x64xf32>
    %226 = math.tanh %225 : vector<2x64xf32>
    %227 = arith.mulf %220, %226 : vector<2x64xf32>
    %228 = vector.broadcast %8 : vector<1x64xf32> to vector<2x64xf32>
    %229 = arith.mulf %227, %228 : vector<2x64xf32>
    %cst_46 = arith.constant dense<0.000000e+00> : vector<2xf32>
    %230 = vector.multi_reduction <add>, %229, %cst_46 [1] : vector<2x64xf32> to vector<2xf32>
    %231 = vector.shape_cast %230 : vector<2xf32> to vector<2x1xf32>
    %c7_i32 = arith.constant 7 : i32
    %232 = vector.broadcast %c7_i32 : i32 to vector<2x8xi32>
    %233 = arith.cmpi eq, %11, %232 : vector<2x8xi32>
    %234 = vector.shape_cast %231 : vector<2x1xf32> to vector<2x1xf32>
    %235 = vector.broadcast %234 : vector<2x1xf32> to vector<2x8xf32>
    %236 = arith.select %233, %235, %208 : vector<2x8xi1>, vector<2x8xf32>
    %c0_47 = arith.constant 0 : index
    %237 = memref.load %arg5[%c0_47] : memref<1xf32, #tpu.memory_space<smem>>
    %238 = vector.broadcast %237 : f32 to vector<2x8xf32>
    %239 = arith.addf %236, %238 : vector<2x8xf32>
    %240 = arith.negf %239 : vector<2x8xf32>
    %241 = math.exp %240 : vector<2x8xf32>
    %cst_48 = arith.constant 1.000000e+00 : f32
    %242 = vector.broadcast %cst_48 : f32 to vector<2x8xf32>
    %243 = arith.addf %242, %241 : vector<2x8xf32>
    %244 = arith.divf %242, %243 : vector<2x8xf32>
    %c0_49 = arith.constant 0 : index
    %c0_50 = arith.constant 0 : index
    %245 = vector.load %arg6[%c0_49, %c0_50] : memref<2x8xf32, #tpu.memory_space<vmem>>, vector<2x8xf32>
    tpu.vector_store %arg6[%c0_49, %c0_50], %244 {strides = array<i32>} : memref<2x8xf32, #tpu.memory_space<vmem>>, vector<2x8xf32>,
    return
  }
}

</mosaic_0001>

<llo_original>
// kernel: lstm_network_forward.1
$region0: #{lstm_network_forward.1}
  #allocation0 [shape = 'u32[]', space=smem, size = 0x4, offset = 0x4, fixed_abs, tag = 'smem constant byte address 0x4 - core index']
  #allocation1 [shape = 'u32[144,128]{1,0:T(1,128)}', space=vmem, size = 0x12000, scoped, tag = 'internal scratch']
  #allocation2 [shape = 'f32[16,256]{1,0:T(8,128)}', space=vmem, size = 0x4000, scoped, tag = 'scratch operand']
  #allocation3 [shape = 'f32[1]{0:T(128)S(6)}', space=smem, size = 0x200, scoped, tag = 'scoped memory for lstm_network_forward.1']
  %s0 = inlined_call_operand.vmem [shape: f32[16,13], index: 0, kind: input, shape index: {}]
  %s1 = inlined_call_operand.vmem [shape: f32[13,256], index: 1, kind: input, shape index: {}]
  %s2 = inlined_call_operand.hbm [shape: f32[16,256], index: 2, kind: input, shape index: {}]
  %s3 = inlined_call_operand.vmem [shape: f32[1,256], index: 3, kind: input, shape index: {}]
  %s4 = inlined_call_operand.vmem [shape: f32[1,64], index: 4, kind: input, shape index: {}]
  %s5 = inlined_call_operand.<no memory space> [shape: f32[1], index: 5, kind: input, shape index: {}]
  %s6 = inlined_call_operand.hbm [shape: f32[2,8], index: 6, kind: output, shape index: {}]
  %s7 = sld [smem:[#allocation0]]
  $region38: #{lstm_network_forward.1} parent=0
    _
  %s9 = ssub.s32 1, %s7
  %s10 = scalar_select 0, %s9, %s7
  %11 = sst [smem:[#allocation3]] %s5
  $region1: #{lstm_network_forward.1} parent=0
    #allocation4 [shape = 'u8[16384]{0}', space=vmem, size = 0x4000, scoped, tag = 'input window, operand 2, single buffered']
    #allocation5 [shape = 's32[1]{0}', space=sflag, size = 0x4, scoped, tag = 'scoped memory for lstm_network_forward.1']
    #allocation6 [shape = 's32[1]{0}', space=sflag, size = 0x4, scoped, tag = 'scoped memory for lstm_network_forward.1']
    #allocation7 [shape = 'u8[1024]{0}', space=vmem, size = 0x400, scoped, tag = 'output window, operand 0, single buffered']
    %12 = vsyncpa [#allocation5], 0
    %13 = vsyncpa [#allocation6], 0
    // Predicated region
    $region2: #{lstm_network_forward.1} parent=1 // pred_check
      _
    $region3: #{lstm_network_forward.1} parent=1 // pred_check_branch
      %15 = sbr.rel (0) target = $region5
    $region4: #{lstm_network_forward.1} parent=1 // pred_region
      _
    $region5: #{lstm_network_forward.1} parent=1 // pred_fallthru
      _
    // Predicated region
    $region6: #{lstm_network_forward.1} parent=1 // pred_check
      _
    $region7: #{lstm_network_forward.1} parent=1 // pred_check_branch
      %17 = sbr.rel (0) target = $region9
    $region8: #{lstm_network_forward.1} parent=1 // pred_region
      _
    $region9: #{lstm_network_forward.1} parent=1 // pred_fallthru
      _
    // Predicated region
    $region10: #{lstm_network_forward.1} parent=1 // pred_check
      _
    $region11: #{lstm_network_forward.1} parent=1 // pred_check_branch
      %19 = sbr.rel (0) target = $region13
    $region12: #{lstm_network_forward.1} parent=1 // pred_region
      %s21 = ssub.s32 512, 512
      %22 = vsyncadd [#allocation5], %s21
      %s23 = sshll.u32 [#allocation4], 4
      %s24 = int_to_ptr.vmem [resolvable:$true] %s23
      %29 = dma.hbm_to_vmem [thread:$0]  %s2, 512, %s24, [#allocation5], 256, 256, 16
    $region13: #{lstm_network_forward.1} parent=1 // pred_fallthru
      _
    // Predicated region
    $region14: #{lstm_network_forward.1} parent=1 // pred_check
      _
    $region15: #{lstm_network_forward.1} parent=1 // pred_check_branch
      %31 = sbr.rel (0) target = $region17
    $region16: #{lstm_network_forward.1} parent=1 // pred_region
      _
    $region17: #{lstm_network_forward.1} parent=1 // pred_fallthru
      _
    // Predicated region
    $region18: #{lstm_network_forward.1} parent=1 // pred_check
      _
    $region19: #{lstm_network_forward.1} parent=1 // pred_check_branch
      %33 = sbr.rel (0) target = $region21
    $region20: #{lstm_network_forward.1} parent=1 // pred_region
      _
    $region21: #{lstm_network_forward.1} parent=1 // pred_fallthru
      _
    // Predicated region
    $region22: #{lstm_network_forward.1} parent=1 // pred_check
      _
    $region23: #{lstm_network_forward.1} parent=1 // pred_check_branch
      %35 = sbr.rel (0) target = $region25
    $region24: #{lstm_network_forward.1} parent=1 // pred_region
      _
    $region25: #{lstm_network_forward.1} parent=1 // pred_fallthru
      _
    // Predicated region
    $region26: #{lstm_network_forward.1} parent=1 // pred_check
      _
    $region27: #{lstm_network_forward.1} parent=1 // pred_check_branch
      %37 = sbr.rel (0) target = $region29
    $region28: #{lstm_network_forward.1} parent=1 // pred_region
      %38 = dma.done [#allocation5], 512
    $region29: #{lstm_network_forward.1} parent=1 // pred_fallthru
      _
    %v39 = vld [vmem:[%s0] sm:$0xff]
    %v40 = vld [vmem:[%s0 + $0x8] sm:$0xff]
    %v41 = vld [vmem:[%s1] sm:$0xff]
    %v42 = vld [vmem:[%s1 + $0x8] sm:$0xff]
    %v43 = vld [vmem:[%s1 + $0x10] sm:$0x1f]
    %v44 = vld [vmem:[%s1 + $0x18] sm:$0x1f]
    %v45 = vld [vmem:[%s3] sm:$0x3]
    %v47 = vlaneseq
    %v48 = vshrl.u32 %v47, 7
    %v49 = vsub.s32 0, %v48
    %v50 = vrot.slane %v45, %v49
    %v51 = vlaneseq
    %v52 = vshrl.u32 %v51, 7
    %v53 = vsub.s32 1, %v52
    %v54 = vrot.slane %v45, %v53
    %vm57 = vcmask 105472
    %v59 = vsel %vm57, %v39, 0
    %v62 = vsel %vm57, %v40, 0
    %vm64 = vcmask 1044480
    %v66 = vsel %vm64, %v43, 0
    %v69 = vsel %vm64, %v44, 0
    %71 = vmatprep.subr.mxu0 0.0
    %72 = vmatpush1.msra.mxu0 0.0
    %73 = vmatprep.subr.mxu0 0.0
    %74 = vmatpush1.msra.mxu0 0.0
    %75 = vmatprep.subr.mxu0 0.0
    %76 = vmatpush1.msra.mxu0 0.0
    %77 = vmatprep.subr.mxu0 0.0
    %78 = vmatpush1.msra.mxu0 0.0
    %79 = vmatprep.subr.mxu0 0.0
    %80 = vmatpush1.msra.mxu0 0.0
    %81 = vmatprep.subr.mxu0 0.0
    %82 = vmatpush1.msra.mxu0 0.0
    %83 = vmatprep.subr.mxu0 0.0
    %84 = vmatpush1.msra.mxu0 0.0
    %85 = vmatprep.subr.mxu0 0.0
    %86 = vmatpush1.msra.mxu0 0.0
    %87 = vmatprep.subr.mxu0 0.0
    %88 = vmatpush1.msra.mxu0 0.0
    %89 = vmatprep.subr.mxu0 0.0
    %90 = vmatpush1.msra.mxu0 0.0
    %91 = vmatprep.subr.mxu0 0.0
    %92 = vmatpush1.msra.mxu0 0.0
    %93 = vmatprep.subr.mxu0 0.0
    %94 = vmatpush1.msra.mxu0 0.0
    %95 = vmatprep.subr.mxu0 0.0
    %96 = vmatpush1.msra.mxu0 0.0
    %97 = vmatprep.subr.mxu0 0.0
    %98 = vmatpush1.msra.mxu0 0.0
    %99 = vmatprep.subr.mxu0 %v69
    %100 = vmatpush1.msra.mxu0 %v66
    %101 = vmatprep.subr.mxu0 %v42
    %102 = vmatpush1.msra.mxu0 %v41
    %103 = vmatprep.subr.mxu0 0.0
    %104 = vmatpush2.msra.mxu0 0.0
    %105 = vmatprep.subr.mxu0 0.0
    %106 = vmatpush2.msra.mxu0 0.0
    %107 = vmatprep.subr.mxu0 0.0
    %108 = vmatpush2.msra.mxu0 0.0
    %109 = vmatprep.subr.mxu0 0.0
    %110 = vmatpush2.msra.mxu0 0.0
    %111 = vmatprep.subr.mxu0 0.0
    %112 = vmatpush2.msra.mxu0 0.0
    %113 = vmatprep.subr.mxu0 0.0
    %114 = vmatpush2.msra.mxu0 0.0
    %115 = vmatprep.subr.mxu0 0.0
    %116 = vmatpush2.msra.mxu0 0.0
    %117 = vmatprep.subr.mxu0 0.0
    %118 = vmatpush2.msra.mxu0 0.0
    %119 = vmatprep.subr.mxu0 0.0
    %120 = vmatpush2.msra.mxu0 0.0
    %121 = vmatprep.subr.mxu0 0.0
    %122 = vmatpush2.msra.mxu0 0.0
    %123 = vmatprep.subr.mxu0 0.0
    %124 = vmatpush2.msra.mxu0 0.0
    %125 = vmatprep.subr.mxu0 0.0
    %126 = vmatpush2.msra.mxu0 0.0
    %127 = vmatprep.subr.mxu0 0.0
    %128 = vmatpush2.msra.mxu0 0.0
    %129 = vmatprep.subr.mxu0 0.0
    %130 = vmatpush2.msra.mxu0 0.0
    %131 = vmatprep.subr.mxu0 0.0
    %132 = vmatpush2.msra.mxu0 0.0
    %133 = vmatprep.subr.mxu0 0.0
    %134 = vmatpush2.msra.mxu0 0.0
    %135 = vmatprep.mubr.f32.mxu0 0.0
    %136 = vmatmul.mubr.f32.gmra.mxu0 %v59
    %v137 = vpop.f32.mrf.mxu0
    %v138 = vadd.f32 %v50, %v137
    %v139 = vpop.f32.mrf.mxu0
    %v140 = vadd.f32 %v54, %v139
    %141 = vmatprep.mubr.f32.mxu0 0.0
    %142 = vmatmul.mubr.f32.gmra.mxu0 %v62
    %v143 = vpop.f32.mrf.mxu0
    %v144 = vadd.f32 %v50, %v143
    %v145 = vpop.f32.mrf.mxu0
    %v146 = vadd.f32 %v54, %v145
    %147 = vdwg.mxu0
    %148 = vst [vmem:[#allocation2] sm:$0xff] %v138
    %149 = vst [vmem:[#allocation2 + $0x8] sm:$0xff] %v140
    %150 = vst [vmem:[#allocation2 + $0x10] sm:$0xff] %v144
    %151 = vst [vmem:[#allocation2 + $0x18] sm:$0xff] %v146
    %v152 = vld [vmem:[#allocation4] sm:$0xff]
    %v153 = vld [vmem:[#allocation4 + $0x8] sm:$0xff]
    %v154 = vld [vmem:[#allocation4 + $0x10] sm:$0xff]
    %v155 = vld [vmem:[#allocation4 + $0x18] sm:$0xff]
    %v156 = vld [vmem:[%s4] sm:$0x1]
    %v157 = vlaneseq
    %v158 = vand.u32 %v157, 127
    %v159 = vld [vmem:[#allocation2] sm:$0x3]
    %v160 = vld [vmem:[#allocation2 + $0x8] sm:$0x3]
    %vm161 = vcmask 130048
    %v163 = vsel %vm161, 0.0, 0
    %165 = vmatprep.subr.mxu0 0.0
    %166 = vmatpush1.msra.mxu0 0.0
    %167 = vmatprep.subr.mxu0 0.0
    %168 = vmatpush1.msra.mxu0 0.0
    %169 = vmatprep.subr.mxu0 0.0
    %170 = vmatpush1.msra.mxu0 0.0
    %171 = vmatprep.subr.mxu0 0.0
    %172 = vmatpush1.msra.mxu0 0.0
    %173 = vmatprep.subr.mxu0 0.0
    %174 = vmatpush1.msra.mxu0 0.0
    %175 = vmatprep.subr.mxu0 0.0
    %176 = vmatpush1.msra.mxu0 0.0
    %177 = vmatprep.subr.mxu0 0.0
    %178 = vmatpush1.msra.mxu0 0.0
    %179 = vmatprep.subr.mxu0 0.0
    %180 = vmatpush1.msra.mxu0 0.0
    %181 = vmatprep.subr.mxu0 0.0
    %182 = vmatpush1.msra.mxu0 0.0
    %183 = vmatprep.subr.mxu0 0.0
    %184 = vmatpush1.msra.mxu0 0.0
    %185 = vmatprep.subr.mxu0 0.0
    %186 = vmatpush1.msra.mxu0 0.0
    %187 = vmatprep.subr.mxu0 0.0
    %188 = vmatpush1.msra.mxu0 0.0
    %189 = vmatprep.subr.mxu0 0.0
    %190 = vmatpush1.msra.mxu0 0.0
    %191 = vmatprep.subr.mxu0 0.0
    %192 = vmatpush1.msra.mxu0 0.0
    %193 = vmatprep.subr.mxu0 %v155
    %194 = vmatpush1.msra.mxu0 %v154
    %195 = vmatprep.subr.mxu0 %v153
    %196 = vmatpush1.msra.mxu0 %v152
    %197 = vmatprep.subr.mxu0 0.0
    %198 = vmatpush2.msra.mxu0 0.0
    %199 = vmatprep.subr.mxu0 0.0
    %200 = vmatpush2.msra.mxu0 0.0
    %201 = vmatprep.subr.mxu0 0.0
    %202 = vmatpush2.msra.mxu0 0.0
    %203 = vmatprep.subr.mxu0 0.0
    %204 = vmatpush2.msra.mxu0 0.0
    %205 = vmatprep.subr.mxu0 0.0
    %206 = vmatpush2.msra.mxu0 0.0
    %207 = vmatprep.subr.mxu0 0.0
    %208 = vmatpush2.msra.mxu0 0.0
    %209 = vmatprep.subr.mxu0 0.0
    %210 = vmatpush2.msra.mxu0 0.0
    %211 = vmatprep.subr.mxu0 0.0
    %212 = vmatpush2.msra.mxu0 0.0
    %213 = vmatprep.subr.mxu0 0.0
    %214 = vmatpush2.msra.mxu0 0.0
    %215 = vmatprep.subr.mxu0 0.0
    %216 = vmatpush2.msra.mxu0 0.0
    %217 = vmatprep.subr.mxu0 0.0
    %218 = vmatpush2.msra.mxu0 0.0
    %219 = vmatprep.subr.mxu0 0.0
    %220 = vmatpush2.msra.mxu0 0.0
    %221 = vmatprep.subr.mxu0 0.0
    %222 = vmatpush2.msra.mxu0 0.0
    %223 = vmatprep.subr.mxu0 0.0
    %224 = vmatpush2.msra.mxu0 0.0
    %225 = vmatprep.subr.mxu0 0.0
    %226 = vmatpush2.msra.mxu0 0.0
    %227 = vmatprep.subr.mxu0 0.0
    %228 = vmatpush2.msra.mxu0 0.0
    %229 = vmatprep.mubr.f32.mxu0 0.0
    %230 = vmatmul.mubr.f32.gmra.mxu0 %v163
    %v231 = vpop.f32.mrf.mxu0
    %v232 = vadd.f32 0.0, %v231
    %v233 = vpop.f32.mrf.mxu0
    %v234 = vadd.f32 0.0, %v233
    %235 = vdwg.mxu0
    %v236 = vadd.f32 %v159, %v232
    %v237 = vadd.f32 %v160, %v234
    %v238 = vxor.u32 %v236, 2147483648
    %v239 = vxor.u32 %v237, 2147483648
    %v240 = vmul.f32 %v238, 1.442695
    %v241 = vpow.pop %v240
    %v242 = vmul.f32 %v239, 1.442695
    %v243 = vpow.pop %v242
    %v244 = vadd.f32 %v241, 1.0
    %v245 = vadd.f32 %v243, 1.0
    %v246 = vrcp.pop %v244
    %v247 = vmul.f32 1.0, %v246
    %v248 = vrcp.pop %v245
    %v249 = vmul.f32 1.0, %v248
    %v250 = vtanh.pop %v237
    %v251 = vmul.f32 %v247, 0.0
    %253 = vrot.lane.b32.xlu0 %v250, 64
    %v254 = vpop.permute.xlu0 %253
    %v256 = vmul.f32 %v247, %v254
    %258 = vrot.lane.b32.xlu0 %v256, 64
    %v259 = vpop.permute.xlu0 %258
    %v261 = vadd.f32 %v251, %v259
    %v262 = vtanh.pop %v261
    %264 = vrot.lane.b32.xlu0 %v262, 64
    %v265 = vpop.permute.xlu0 %264
    %v267 = vmul.f32 %v249, %v265
    %v269 = vlaneseq
    %v270 = vshrl.u32 %v269, 7
    %v271 = vsub.s32 0, %v270
    %v272 = vrot.slane %v156, %v271
    %v274 = vmul.f32 %v267, %v272
    %vm275 = vcmask 517120
    %v276 = vsel %vm275, %v274, 0.0
    %277 = vadd.xlane.f32.xlu0 %v276
    %v278 = vpop.xlane.xlu0 %277
    %vm279 = vcmp.eq.s32.totalorder %v158, 0
    %v280 = vsel %vm279, %v278, 0.0
    %v281 = vld [vmem:[#allocation2] sm:$0xc]
    %v282 = vld [vmem:[#allocation2 + $0x8] sm:$0xc]
    %v284 = vsel %vm161, %v267, 0
    %286 = vmatprep.subr.mxu0 0.0
    %287 = vmatpush1.msra.mxu0 0.0
    %288 = vmatprep.subr.mxu0 0.0
    %289 = vmatpush1.msra.mxu0 0.0
    %290 = vmatprep.subr.mxu0 0.0
    %291 = vmatpush1.msra.mxu0 0.0
    %292 = vmatprep.subr.mxu0 0.0
    %293 = vmatpush1.msra.mxu0 0.0
    %294 = vmatprep.subr.mxu0 0.0
    %295 = vmatpush1.msra.mxu0 0.0
    %296 = vmatprep.subr.mxu0 0.0
    %297 = vmatpush1.msra.mxu0 0.0
    %298 = vmatprep.subr.mxu0 0.0
    %299 = vmatpush1.msra.mxu0 0.0
    %300 = vmatprep.subr.mxu0 0.0
    %301 = vmatpush1.msra.mxu0 0.0
    %302 = vmatprep.subr.mxu0 0.0
    %303 = vmatpush1.msra.mxu0 0.0
    %304 = vmatprep.subr.mxu0 0.0
    %305 = vmatpush1.msra.mxu0 0.0
    %306 = vmatprep.subr.mxu0 0.0
    %307 = vmatpush1.msra.mxu0 0.0
    %308 = vmatprep.subr.mxu0 0.0
    %309 = vmatpush1.msra.mxu0 0.0
    %310 = vmatprep.subr.mxu0 0.0
    %311 = vmatpush1.msra.mxu0 0.0
    %312 = vmatprep.subr.mxu0 0.0
    %313 = vmatpush1.msra.mxu0 0.0
    %314 = vmatprep.subr.mxu0 %v155
    %315 = vmatpush1.msra.mxu0 %v154
    %316 = vmatprep.subr.mxu0 %v153
    %317 = vmatpush1.msra.mxu0 %v152
    %318 = vmatprep.subr.mxu0 0.0
    %319 = vmatpush2.msra.mxu0 0.0
    %320 = vmatprep.subr.mxu0 0.0
    %321 = vmatpush2.msra.mxu0 0.0
    %322 = vmatprep.subr.mxu0 0.0
    %323 = vmatpush2.msra.mxu0 0.0
    %324 = vmatprep.subr.mxu0 0.0
    %325 = vmatpush2.msra.mxu0 0.0
    %326 = vmatprep.subr.mxu0 0.0
    %327 = vmatpush2.msra.mxu0 0.0
    %328 = vmatprep.subr.mxu0 0.0
    %329 = vmatpush2.msra.mxu0 0.0
    %330 = vmatprep.subr.mxu0 0.0
    %331 = vmatpush2.msra.mxu0 0.0
    %332 = vmatprep.subr.mxu0 0.0
    %333 = vmatpush2.msra.mxu0 0.0
    %334 = vmatprep.subr.mxu0 0.0
    %335 = vmatpush2.msra.mxu0 0.0
    %336 = vmatprep.subr.mxu0 0.0
    %337 = vmatpush2.msra.mxu0 0.0
    %338 = vmatprep.subr.mxu0 0.0
    %339 = vmatpush2.msra.mxu0 0.0
    %340 = vmatprep.subr.mxu0 0.0
    %341 = vmatpush2.msra.mxu0 0.0
    %342 = vmatprep.subr.mxu0 0.0
    %343 = vmatpush2.msra.mxu0 0.0
    %344 = vmatprep.subr.mxu0 0.0
    %345 = vmatpush2.msra.mxu0 0.0
    %346 = vmatprep.subr.mxu0 0.0
    %347 = vmatpush2.msra.mxu0 0.0
    %348 = vmatprep.subr.mxu0 0.0
    %349 = vmatpush2.msra.mxu0 0.0
    %350 = vmatprep.mubr.f32.mxu0 0.0
    %351 = vmatmul.mubr.f32.gmra.mxu0 %v284
    %v352 = vpop.f32.mrf.mxu0
    %v353 = vadd.f32 0.0, %v352
    %v354 = vpop.f32.mrf.mxu0
    %v355 = vadd.f32 0.0, %v354
    %356 = vdwg.mxu0
    %v359 = vrot.slane %v353, 6
    %v360 = vrot.slane %v355, 6
    %v363 = vadd.f32 %v281, %v359
    %v364 = vadd.f32 %v282, %v360
    %v365 = vxor.u32 %v363, 2147483648
    %v366 = vxor.u32 %v364, 2147483648
    %v367 = vmul.f32 %v365, 1.442695
    %v368 = vpow.pop %v367
    %v369 = vmul.f32 %v366, 1.442695
    %v370 = vpow.pop %v369
    %v371 = vadd.f32 %v368, 1.0
    %v372 = vadd.f32 %v370, 1.0
    %v373 = vrcp.pop %v371
    %v374 = vmul.f32 1.0, %v373
    %v375 = vrcp.pop %v372
    %v376 = vmul.f32 1.0, %v375
    %v377 = vtanh.pop %v364
    %v379 = vrot.slane %v261, 6
    %v381 = vmul.f32 %v374, %v379
    %383 = vrot.lane.b32.xlu0 %v377, 64
    %v384 = vpop.permute.xlu0 %383
    %v386 = vmul.f32 %v374, %v384
    %388 = vrot.lane.b32.xlu0 %v386, 64
    %v389 = vpop.permute.xlu0 %388
    %v391 = vadd.f32 %v381, %v389
    %v392 = vtanh.pop %v391
    %394 = vrot.lane.b32.xlu0 %v392, 64
    %v395 = vpop.permute.xlu0 %394
    %v397 = vmul.f32 %v376, %v395
    %v398 = vmul.f32 %v397, %v272
    %vm399 = vcmask 519170
    %v400 = vsel %vm399, %v398, 0.0
    %401 = vadd.xlane.f32.xlu0 %v400
    %v402 = vpop.xlane.xlu0 %401
    %vm403 = vcmp.eq.s32.totalorder %v158, 1
    %v405 = vrot.slane %v280, 6
    %v407 = vsel %vm403, %v402, %v405
    %v408 = vld [vmem:[#allocation2] sm:$0x30]
    %v409 = vld [vmem:[#allocation2 + $0x8] sm:$0x30]
    %v411 = vrot.slane %v397, 2
    %v412 = vsel %vm161, %v411, 0
    %414 = vmatprep.subr.mxu0 0.0
    %415 = vmatpush1.msra.mxu0 0.0
    %416 = vmatprep.subr.mxu0 0.0
    %417 = vmatpush1.msra.mxu0 0.0
    %418 = vmatprep.subr.mxu0 0.0
    %419 = vmatpush1.msra.mxu0 0.0
    %420 = vmatprep.subr.mxu0 0.0
    %421 = vmatpush1.msra.mxu0 0.0
    %422 = vmatprep.subr.mxu0 0.0
    %423 = vmatpush1.msra.mxu0 0.0
    %424 = vmatprep.subr.mxu0 0.0
    %425 = vmatpush1.msra.mxu0 0.0
    %426 = vmatprep.subr.mxu0 0.0
    %427 = vmatpush1.msra.mxu0 0.0
    %428 = vmatprep.subr.mxu0 0.0
    %429 = vmatpush1.msra.mxu0 0.0
    %430 = vmatprep.subr.mxu0 0.0
    %431 = vmatpush1.msra.mxu0 0.0
    %432 = vmatprep.subr.mxu0 0.0
    %433 = vmatpush1.msra.mxu0 0.0
    %434 = vmatprep.subr.mxu0 0.0
    %435 = vmatpush1.msra.mxu0 0.0
    %436 = vmatprep.subr.mxu0 0.0
    %437 = vmatpush1.msra.mxu0 0.0
    %438 = vmatprep.subr.mxu0 0.0
    %439 = vmatpush1.msra.mxu0 0.0
    %440 = vmatprep.subr.mxu0 0.0
    %441 = vmatpush1.msra.mxu0 0.0
    %442 = vmatprep.subr.mxu0 %v155
    %443 = vmatpush1.msra.mxu0 %v154
    %444 = vmatprep.subr.mxu0 %v153
    %445 = vmatpush1.msra.mxu0 %v152
    %446 = vmatprep.subr.mxu0 0.0
    %447 = vmatpush2.msra.mxu0 0.0
    %448 = vmatprep.subr.mxu0 0.0
    %449 = vmatpush2.msra.mxu0 0.0
    %450 = vmatprep.subr.mxu0 0.0
    %451 = vmatpush2.msra.mxu0 0.0
    %452 = vmatprep.subr.mxu0 0.0
    %453 = vmatpush2.msra.mxu0 0.0
    %454 = vmatprep.subr.mxu0 0.0
    %455 = vmatpush2.msra.mxu0 0.0
    %456 = vmatprep.subr.mxu0 0.0
    %457 = vmatpush2.msra.mxu0 0.0
    %458 = vmatprep.subr.mxu0 0.0
    %459 = vmatpush2.msra.mxu0 0.0
    %460 = vmatprep.subr.mxu0 0.0
    %461 = vmatpush2.msra.mxu0 0.0
    %462 = vmatprep.subr.mxu0 0.0
    %463 = vmatpush2.msra.mxu0 0.0
    %464 = vmatprep.subr.mxu0 0.0
    %465 = vmatpush2.msra.mxu0 0.0
    %466 = vmatprep.subr.mxu0 0.0
    %467 = vmatpush2.msra.mxu0 0.0
    %468 = vmatprep.subr.mxu0 0.0
    %469 = vmatpush2.msra.mxu0 0.0
    %470 = vmatprep.subr.mxu0 0.0
    %471 = vmatpush2.msra.mxu0 0.0
    %472 = vmatprep.subr.mxu0 0.0
    %473 = vmatpush2.msra.mxu0 0.0
    %474 = vmatprep.subr.mxu0 0.0
    %475 = vmatpush2.msra.mxu0 0.0
    %476 = vmatprep.subr.mxu0 0.0
    %477 = vmatpush2.msra.mxu0 0.0
    %478 = vmatprep.mubr.f32.mxu0 0.0
    %479 = vmatmul.mubr.f32.gmra.mxu0 %v412
    %v480 = vpop.f32.mrf.mxu0
    %v481 = vadd.f32 0.0, %v480
    %v482 = vpop.f32.mrf.mxu0
    %v483 = vadd.f32 0.0, %v482
    %484 = vdwg.mxu0
    %v487 = vrot.slane %v481, 4
    %v488 = vrot.slane %v483, 4
    %v491 = vadd.f32 %v408, %v487
    %v492 = vadd.f32 %v409, %v488
    %v493 = vxor.u32 %v491, 2147483648
    %v494 = vxor.u32 %v492, 2147483648
    %v495 = vmul.f32 %v493, 1.442695
    %v496 = vpow.pop %v495
    %v497 = vmul.f32 %v494, 1.442695
    %v498 = vpow.pop %v497
    %v499 = vadd.f32 %v496, 1.0
    %v500 = vadd.f32 %v498, 1.0
    %v501 = vrcp.pop %v499
    %v502 = vmul.f32 1.0, %v501
    %v503 = vrcp.pop %v500
    %v504 = vmul.f32 1.0, %v503
    %v505 = vtanh.pop %v492
    %v507 = vrot.slane %v391, 6
    %v509 = vmul.f32 %v502, %v507
    %511 = vrot.lane.b32.xlu0 %v505, 64
    %v512 = vpop.permute.xlu0 %511
    %v514 = vmul.f32 %v502, %v512
    %516 = vrot.lane.b32.xlu0 %v514, 64
    %v517 = vpop.permute.xlu0 %516
    %v519 = vadd.f32 %v509, %v517
    %v520 = vtanh.pop %v519
    %522 = vrot.lane.b32.xlu0 %v520, 64
    %v523 = vpop.permute.xlu0 %522
    %v525 = vmul.f32 %v504, %v523
    %v526 = vmul.f32 %v525, %v272
    %vm527 = vcmask 521220
    %v528 = vsel %vm527, %v526, 0.0
    %529 = vadd.xlane.f32.xlu0 %v528
    %v530 = vpop.xlane.xlu0 %529
    %vm531 = vcmp.eq.s32.totalorder %v158, 2
    %v533 = vrot.slane %v407, 6
    %v535 = vsel %vm531, %v530, %v533
    %v536 = vld [vmem:[#allocation2] sm:$0xc0]
    %v537 = vld [vmem:[#allocation2 + $0x8] sm:$0xc0]
    %v539 = vrot.slane %v525, 4
    %v540 = vsel %vm161, %v539, 0
    %542 = vmatprep.subr.mxu0 0.0
    %543 = vmatpush1.msra.mxu0 0.0
    %544 = vmatprep.subr.mxu0 0.0
    %545 = vmatpush1.msra.mxu0 0.0
    %546 = vmatprep.subr.mxu0 0.0
    %547 = vmatpush1.msra.mxu0 0.0
    %548 = vmatprep.subr.mxu0 0.0
    %549 = vmatpush1.msra.mxu0 0.0
    %550 = vmatprep.subr.mxu0 0.0
    %551 = vmatpush1.msra.mxu0 0.0
    %552 = vmatprep.subr.mxu0 0.0
    %553 = vmatpush1.msra.mxu0 0.0
    %554 = vmatprep.subr.mxu0 0.0
    %555 = vmatpush1.msra.mxu0 0.0
    %556 = vmatprep.subr.mxu0 0.0
    %557 = vmatpush1.msra.mxu0 0.0
    %558 = vmatprep.subr.mxu0 0.0
    %559 = vmatpush1.msra.mxu0 0.0
    %560 = vmatprep.subr.mxu0 0.0
    %561 = vmatpush1.msra.mxu0 0.0
    %562 = vmatprep.subr.mxu0 0.0
    %563 = vmatpush1.msra.mxu0 0.0
    %564 = vmatprep.subr.mxu0 0.0
    %565 = vmatpush1.msra.mxu0 0.0
    %566 = vmatprep.subr.mxu0 0.0
    %567 = vmatpush1.msra.mxu0 0.0
    %568 = vmatprep.subr.mxu0 0.0
    %569 = vmatpush1.msra.mxu0 0.0
    %570 = vmatprep.subr.mxu0 %v155
    %571 = vmatpush1.msra.mxu0 %v154
    %572 = vmatprep.subr.mxu0 %v153
    %573 = vmatpush1.msra.mxu0 %v152
    %574 = vmatprep.subr.mxu0 0.0
    %575 = vmatpush2.msra.mxu0 0.0
    %576 = vmatprep.subr.mxu0 0.0
    %577 = vmatpush2.msra.mxu0 0.0
    %578 = vmatprep.subr.mxu0 0.0
    %579 = vmatpush2.msra.mxu0 0.0
    %580 = vmatprep.subr.mxu0 0.0
    %581 = vmatpush2.msra.mxu0 0.0
    %582 = vmatprep.subr.mxu0 0.0
    %583 = vmatpush2.msra.mxu0 0.0
    %584 = vmatprep.subr.mxu0 0.0
    %585 = vmatpush2.msra.mxu0 0.0
    %586 = vmatprep.subr.mxu0 0.0
    %587 = vmatpush2.msra.mxu0 0.0
    %588 = vmatprep.subr.mxu0 0.0
    %589 = vmatpush2.msra.mxu0 0.0
    %590 = vmatprep.subr.mxu0 0.0
    %591 = vmatpush2.msra.mxu0 0.0
    %592 = vmatprep.subr.mxu0 0.0
    %593 = vmatpush2.msra.mxu0 0.0
    %594 = vmatprep.subr.mxu0 0.0
    %595 = vmatpush2.msra.mxu0 0.0
    %596 = vmatprep.subr.mxu0 0.0
    %597 = vmatpush2.msra.mxu0 0.0
    %598 = vmatprep.subr.mxu0 0.0
    %599 = vmatpush2.msra.mxu0 0.0
    %600 = vmatprep.subr.mxu0 0.0
    %601 = vmatpush2.msra.mxu0 0.0
    %602 = vmatprep.subr.mxu0 0.0
    %603 = vmatpush2.msra.mxu0 0.0
    %604 = vmatprep.subr.mxu0 0.0
    %605 = vmatpush2.msra.mxu0 0.0
    %606 = vmatprep.mubr.f32.mxu0 0.0
    %607 = vmatmul.mubr.f32.gmra.mxu0 %v540
    %v608 = vpop.f32.mrf.mxu0
    %v609 = vadd.f32 0.0, %v608
    %v610 = vpop.f32.mrf.mxu0
    %v611 = vadd.f32 0.0, %v610
    %612 = vdwg.mxu0
    %v615 = vrot.slane %v609, 2
    %v616 = vrot.slane %v611, 2
    %v619 = vadd.f32 %v536, %v615
    %v620 = vadd.f32 %v537, %v616
    %v621 = vxor.u32 %v619, 2147483648
    %v622 = vxor.u32 %v620, 2147483648
    %v623 = vmul.f32 %v621, 1.442695
    %v624 = vpow.pop %v623
    %v625 = vmul.f32 %v622, 1.442695
    %v626 = vpow.pop %v625
    %v627 = vadd.f32 %v624, 1.0
    %v628 = vadd.f32 %v626, 1.0
    %v629 = vrcp.pop %v627
    %v630 = vmul.f32 1.0, %v629
    %v631 = vrcp.pop %v628
    %v632 = vmul.f32 1.0, %v631
    %v633 = vtanh.pop %v620
    %v635 = vrot.slane %v519, 6
    %v637 = vmul.f32 %v630, %v635
    %639 = vrot.lane.b32.xlu0 %v633, 64
    %v640 = vpop.permute.xlu0 %639
    %v642 = vmul.f32 %v630, %v640
    %644 = vrot.lane.b32.xlu0 %v642, 64
    %v645 = vpop.permute.xlu0 %644
    %v647 = vadd.f32 %v637, %v645
    %v648 = vtanh.pop %v647
    %650 = vrot.lane.b32.xlu0 %v648, 64
    %v651 = vpop.permute.xlu0 %650
    %v653 = vmul.f32 %v632, %v651
    %v654 = vmul.f32 %v653, %v272
    %vm655 = vcmask 523270
    %v656 = vsel %vm655, %v654, 0.0
    %657 = vadd.xlane.f32.xlu0 %v656
    %v658 = vpop.xlane.xlu0 %657
    %vm659 = vcmp.eq.s32.totalorder %v158, 3
    %v661 = vrot.slane %v535, 6
    %v663 = vsel %vm659, %v658, %v661
    %v664 = vld [vmem:[#allocation2 + $0x10] sm:$0x3]
    %v665 = vld [vmem:[#allocation2 + $0x18] sm:$0x3]
    %v667 = vrot.slane %v653, 6
    %v668 = vsel %vm161, %v667, 0
    %670 = vmatprep.subr.mxu0 0.0
    %671 = vmatpush1.msra.mxu0 0.0
    %672 = vmatprep.subr.mxu0 0.0
    %673 = vmatpush1.msra.mxu0 0.0
    %674 = vmatprep.subr.mxu0 0.0
    %675 = vmatpush1.msra.mxu0 0.0
    %676 = vmatprep.subr.mxu0 0.0
    %677 = vmatpush1.msra.mxu0 0.0
    %678 = vmatprep.subr.mxu0 0.0
    %679 = vmatpush1.msra.mxu0 0.0
    %680 = vmatprep.subr.mxu0 0.0
    %681 = vmatpush1.msra.mxu0 0.0
    %682 = vmatprep.subr.mxu0 0.0
    %683 = vmatpush1.msra.mxu0 0.0
    %684 = vmatprep.subr.mxu0 0.0
    %685 = vmatpush1.msra.mxu0 0.0
    %686 = vmatprep.subr.mxu0 0.0
    %687 = vmatpush1.msra.mxu0 0.0
    %688 = vmatprep.subr.mxu0 0.0
    %689 = vmatpush1.msra.mxu0 0.0
    %690 = vmatprep.subr.mxu0 0.0
    %691 = vmatpush1.msra.mxu0 0.0
    %692 = vmatprep.subr.mxu0 0.0
    %693 = vmatpush1.msra.mxu0 0.0
    %694 = vmatprep.subr.mxu0 0.0
    %695 = vmatpush1.msra.mxu0 0.0
    %696 = vmatprep.subr.mxu0 0.0
    %697 = vmatpush1.msra.mxu0 0.0
    %698 = vmatprep.subr.mxu0 %v155
    %699 = vmatpush1.msra.mxu0 %v154
    %700 = vmatprep.subr.mxu0 %v153
    %701 = vmatpush1.msra.mxu0 %v152
    %702 = vmatprep.subr.mxu0 0.0
    %703 = vmatpush2.msra.mxu0 0.0
    %704 = vmatprep.subr.mxu0 0.0
    %705 = vmatpush2.msra.mxu0 0.0
    %706 = vmatprep.subr.mxu0 0.0
    %707 = vmatpush2.msra.mxu0 0.0
    %708 = vmatprep.subr.mxu0 0.0
    %709 = vmatpush2.msra.mxu0 0.0
    %710 = vmatprep.subr.mxu0 0.0
    %711 = vmatpush2.msra.mxu0 0.0
    %712 = vmatprep.subr.mxu0 0.0
    %713 = vmatpush2.msra.mxu0 0.0
    %714 = vmatprep.subr.mxu0 0.0
    %715 = vmatpush2.msra.mxu0 0.0
    %716 = vmatprep.subr.mxu0 0.0
    %717 = vmatpush2.msra.mxu0 0.0
    %718 = vmatprep.subr.mxu0 0.0
    %719 = vmatpush2.msra.mxu0 0.0
    %720 = vmatprep.subr.mxu0 0.0
    %721 = vmatpush2.msra.mxu0 0.0
    %722 = vmatprep.subr.mxu0 0.0
    %723 = vmatpush2.msra.mxu0 0.0
    %724 = vmatprep.subr.mxu0 0.0
    %725 = vmatpush2.msra.mxu0 0.0
    %726 = vmatprep.subr.mxu0 0.0
    %727 = vmatpush2.msra.mxu0 0.0
    %728 = vmatprep.subr.mxu0 0.0
    %729 = vmatpush2.msra.mxu0 0.0
    %730 = vmatprep.subr.mxu0 0.0
    %731 = vmatpush2.msra.mxu0 0.0
    %732 = vmatprep.subr.mxu0 0.0
    %733 = vmatpush2.msra.mxu0 0.0
    %734 = vmatprep.mubr.f32.mxu0 0.0
    %735 = vmatmul.mubr.f32.gmra.mxu0 %v668
    %v736 = vpop.f32.mrf.mxu0
    %v737 = vadd.f32 0.0, %v736
    %v738 = vpop.f32.mrf.mxu0
    %v739 = vadd.f32 0.0, %v738
    %740 = vdwg.mxu0
    %v741 = vadd.f32 %v664, %v737
    %v742 = vadd.f32 %v665, %v739
    %v743 = vxor.u32 %v741, 2147483648
    %v744 = vxor.u32 %v742, 2147483648
    %v745 = vmul.f32 %v743, 1.442695
    %v746 = vpow.pop %v745
    %v747 = vmul.f32 %v744, 1.442695
    %v748 = vpow.pop %v747
    %v749 = vadd.f32 %v746, 1.0
    %v750 = vadd.f32 %v748, 1.0
    %v751 = vrcp.pop %v749
    %v752 = vmul.f32 1.0, %v751
    %v753 = vrcp.pop %v750
    %v754 = vmul.f32 1.0, %v753
    %v755 = vtanh.pop %v742
    %v757 = vrot.slane %v647, 6
    %v759 = vmul.f32 %v752, %v757
    %761 = vrot.lane.b32.xlu0 %v755, 64
    %v762 = vpop.permute.xlu0 %761
    %v764 = vmul.f32 %v752, %v762
    %766 = vrot.lane.b32.xlu0 %v764, 64
    %v767 = vpop.permute.xlu0 %766
    %v769 = vadd.f32 %v759, %v767
    %v770 = vtanh.pop %v769
    %772 = vrot.lane.b32.xlu0 %v770, 64
    %v773 = vpop.permute.xlu0 %772
    %v775 = vmul.f32 %v754, %v773
    %v776 = vmul.f32 %v775, %v272
    %v777 = vsel %vm275, %v776, 0.0
    %778 = vadd.xlane.f32.xlu0 %v777
    %v779 = vpop.xlane.xlu0 %778
    %vm780 = vcmp.eq.s32.totalorder %v158, 4
    %v782 = vrot.slane %v663, 6
    %v784 = vsel %vm780, %v779, %v782
    %v785 = vld [vmem:[#allocation2 + $0x10] sm:$0xc]
    %v786 = vld [vmem:[#allocation2 + $0x18] sm:$0xc]
    %v788 = vsel %vm161, %v775, 0
    %790 = vmatprep.subr.mxu0 0.0
    %791 = vmatpush1.msra.mxu0 0.0
    %792 = vmatprep.subr.mxu0 0.0
    %793 = vmatpush1.msra.mxu0 0.0
    %794 = vmatprep.subr.mxu0 0.0
    %795 = vmatpush1.msra.mxu0 0.0
    %796 = vmatprep.subr.mxu0 0.0
    %797 = vmatpush1.msra.mxu0 0.0
    %798 = vmatprep.subr.mxu0 0.0
    %799 = vmatpush1.msra.mxu0 0.0
    %800 = vmatprep.subr.mxu0 0.0
    %801 = vmatpush1.msra.mxu0 0.0
    %802 = vmatprep.subr.mxu0 0.0
    %803 = vmatpush1.msra.mxu0 0.0
    %804 = vmatprep.subr.mxu0 0.0
    %805 = vmatpush1.msra.mxu0 0.0
    %806 = vmatprep.subr.mxu0 0.0
    %807 = vmatpush1.msra.mxu0 0.0
    %808 = vmatprep.subr.mxu0 0.0
    %809 = vmatpush1.msra.mxu0 0.0
    %810 = vmatprep.subr.mxu0 0.0
    %811 = vmatpush1.msra.mxu0 0.0
    %812 = vmatprep.subr.mxu0 0.0
    %813 = vmatpush1.msra.mxu0 0.0
    %814 = vmatprep.subr.mxu0 0.0
    %815 = vmatpush1.msra.mxu0 0.0
    %816 = vmatprep.subr.mxu0 0.0
    %817 = vmatpush1.msra.mxu0 0.0
    %818 = vmatprep.subr.mxu0 %v155
    %819 = vmatpush1.msra.mxu0 %v154
    %820 = vmatprep.subr.mxu0 %v153
    %821 = vmatpush1.msra.mxu0 %v152
    %822 = vmatprep.subr.mxu0 0.0
    %823 = vmatpush2.msra.mxu0 0.0
    %824 = vmatprep.subr.mxu0 0.0
    %825 = vmatpush2.msra.mxu0 0.0
    %826 = vmatprep.subr.mxu0 0.0
    %827 = vmatpush2.msra.mxu0 0.0
    %828 = vmatprep.subr.mxu0 0.0
    %829 = vmatpush2.msra.mxu0 0.0
    %830 = vmatprep.subr.mxu0 0.0
    %831 = vmatpush2.msra.mxu0 0.0
    %832 = vmatprep.subr.mxu0 0.0
    %833 = vmatpush2.msra.mxu0 0.0
    %834 = vmatprep.subr.mxu0 0.0
    %835 = vmatpush2.msra.mxu0 0.0
    %836 = vmatprep.subr.mxu0 0.0
    %837 = vmatpush2.msra.mxu0 0.0
    %838 = vmatprep.subr.mxu0 0.0
    %839 = vmatpush2.msra.mxu0 0.0
    %840 = vmatprep.subr.mxu0 0.0
    %841 = vmatpush2.msra.mxu0 0.0
    %842 = vmatprep.subr.mxu0 0.0
    %843 = vmatpush2.msra.mxu0 0.0
    %844 = vmatprep.subr.mxu0 0.0
    %845 = vmatpush2.msra.mxu0 0.0
    %846 = vmatprep.subr.mxu0 0.0
    %847 = vmatpush2.msra.mxu0 0.0
    %848 = vmatprep.subr.mxu0 0.0
    %849 = vmatpush2.msra.mxu0 0.0
    %850 = vmatprep.subr.mxu0 0.0
    %851 = vmatpush2.msra.mxu0 0.0
    %852 = vmatprep.subr.mxu0 0.0
    %853 = vmatpush2.msra.mxu0 0.0
    %854 = vmatprep.mubr.f32.mxu0 0.0
    %855 = vmatmul.mubr.f32.gmra.mxu0 %v788
    %v856 = vpop.f32.mrf.mxu0
    %v857 = vadd.f32 0.0, %v856
    %v858 = vpop.f32.mrf.mxu0
    %v859 = vadd.f32 0.0, %v858
    %860 = vdwg.mxu0
    %v863 = vrot.slane %v857, 6
    %v864 = vrot.slane %v859, 6
    %v867 = vadd.f32 %v785, %v863
    %v868 = vadd.f32 %v786, %v864
    %v869 = vxor.u32 %v867, 2147483648
    %v870 = vxor.u32 %v868, 2147483648
    %v871 = vmul.f32 %v869, 1.442695
    %v872 = vpow.pop %v871
    %v873 = vmul.f32 %v870, 1.442695
    %v874 = vpow.pop %v873
    %v875 = vadd.f32 %v872, 1.0
    %v876 = vadd.f32 %v874, 1.0
    %v877 = vrcp.pop %v875
    %v878 = vmul.f32 1.0, %v877
    %v879 = vrcp.pop %v876
    %v880 = vmul.f32 1.0, %v879
    %v881 = vtanh.pop %v868
    %v883 = vrot.slane %v769, 6
    %v885 = vmul.f32 %v878, %v883
    %887 = vrot.lane.b32.xlu0 %v881, 64
    %v888 = vpop.permute.xlu0 %887
    %v890 = vmul.f32 %v878, %v888
    %892 = vrot.lane.b32.xlu0 %v890, 64
    %v893 = vpop.permute.xlu0 %892
    %v895 = vadd.f32 %v885, %v893
    %v896 = vtanh.pop %v895
    %898 = vrot.lane.b32.xlu0 %v896, 64
    %v899 = vpop.permute.xlu0 %898
    %v901 = vmul.f32 %v880, %v899
    %v902 = vmul.f32 %v901, %v272
    %v903 = vsel %vm399, %v902, 0.0
    %904 = vadd.xlane.f32.xlu0 %v903
    %v905 = vpop.xlane.xlu0 %904
    %vm906 = vcmp.eq.s32.totalorder %v158, 5
    %v908 = vrot.slane %v784, 6
    %v910 = vsel %vm906, %v905, %v908
    %v911 = vld [vmem:[#allocation2 + $0x10] sm:$0x30]
    %v912 = vld [vmem:[#allocation2 + $0x18] sm:$0x30]
    %v914 = vrot.slane %v901, 2
    %v915 = vsel %vm161, %v914, 0
    %917 = vmatprep.subr.mxu0 0.0
    %918 = vmatpush1.msra.mxu0 0.0
    %919 = vmatprep.subr.mxu0 0.0
    %920 = vmatpush1.msra.mxu0 0.0
    %921 = vmatprep.subr.mxu0 0.0
    %922 = vmatpush1.msra.mxu0 0.0
    %923 = vmatprep.subr.mxu0 0.0
    %924 = vmatpush1.msra.mxu0 0.0
    %925 = vmatprep.subr.mxu0 0.0
    %926 = vmatpush1.msra.mxu0 0.0
    %927 = vmatprep.subr.mxu0 0.0
    %928 = vmatpush1.msra.mxu0 0.0
    %929 = vmatprep.subr.mxu0 0.0
    %930 = vmatpush1.msra.mxu0 0.0
    %931 = vmatprep.subr.mxu0 0.0
    %932 = vmatpush1.msra.mxu0 0.0
    %933 = vmatprep.subr.mxu0 0.0
    %934 = vmatpush1.msra.mxu0 0.0
    %935 = vmatprep.subr.mxu0 0.0
    %936 = vmatpush1.msra.mxu0 0.0
    %937 = vmatprep.subr.mxu0 0.0
    %938 = vmatpush1.msra.mxu0 0.0
    %939 = vmatprep.subr.mxu0 0.0
    %940 = vmatpush1.msra.mxu0 0.0
    %941 = vmatprep.subr.mxu0 0.0
    %942 = vmatpush1.msra.mxu0 0.0
    %943 = vmatprep.subr.mxu0 0.0
    %944 = vmatpush1.msra.mxu0 0.0
    %945 = vmatprep.subr.mxu0 %v155
    %946 = vmatpush1.msra.mxu0 %v154
    %947 = vmatprep.subr.mxu0 %v153
    %948 = vmatpush1.msra.mxu0 %v152
    %949 = vmatprep.subr.mxu0 0.0
    %950 = vmatpush2.msra.mxu0 0.0
    %951 = vmatprep.subr.mxu0 0.0
    %952 = vmatpush2.msra.mxu0 0.0
    %953 = vmatprep.subr.mxu0 0.0
    %954 = vmatpush2.msra.mxu0 0.0
    %955 = vmatprep.subr.mxu0 0.0
    %956 = vmatpush2.msra.mxu0 0.0
    %957 = vmatprep.subr.mxu0 0.0
    %958 = vmatpush2.msra.mxu0 0.0
    %959 = vmatprep.subr.mxu0 0.0
    %960 = vmatpush2.msra.mxu0 0.0
    %961 = vmatprep.subr.mxu0 0.0
    %962 = vmatpush2.msra.mxu0 0.0
    %963 = vmatprep.subr.mxu0 0.0
    %964 = vmatpush2.msra.mxu0 0.0
    %965 = vmatprep.subr.mxu0 0.0
    %966 = vmatpush2.msra.mxu0 0.0
    %967 = vmatprep.subr.mxu0 0.0
    %968 = vmatpush2.msra.mxu0 0.0
    %969 = vmatprep.subr.mxu0 0.0
    %970 = vmatpush2.msra.mxu0 0.0
    %971 = vmatprep.subr.mxu0 0.0
    %972 = vmatpush2.msra.mxu0 0.0
    %973 = vmatprep.subr.mxu0 0.0
    %974 = vmatpush2.msra.mxu0 0.0
    %975 = vmatprep.subr.mxu0 0.0
    %976 = vmatpush2.msra.mxu0 0.0
    %977 = vmatprep.subr.mxu0 0.0
    %978 = vmatpush2.msra.mxu0 0.0
    %979 = vmatprep.subr.mxu0 0.0
    %980 = vmatpush2.msra.mxu0 0.0
    %981 = vmatprep.mubr.f32.mxu0 0.0
    %982 = vmatmul.mubr.f32.gmra.mxu0 %v915
    %v983 = vpop.f32.mrf.mxu0
    %v984 = vadd.f32 0.0, %v983
    %v985 = vpop.f32.mrf.mxu0
    %v986 = vadd.f32 0.0, %v985
    %987 = vdwg.mxu0
    %v990 = vrot.slane %v984, 4
    %v991 = vrot.slane %v986, 4
    %v994 = vadd.f32 %v911, %v990
    %v995 = vadd.f32 %v912, %v991
    %v996 = vxor.u32 %v994, 2147483648
    %v997 = vxor.u32 %v995, 2147483648
    %v998 = vmul.f32 %v996, 1.442695
    %v999 = vpow.pop %v998
    %v1000 = vmul.f32 %v997, 1.442695
    %v1001 = vpow.pop %v1000
    %v1002 = vadd.f32 %v999, 1.0
    %v1003 = vadd.f32 %v1001, 1.0
    %v1004 = vrcp.pop %v1002
    %v1005 = vmul.f32 1.0, %v1004
    %v1006 = vrcp.pop %v1003
    %v1007 = vmul.f32 1.0, %v1006
    %v1008 = vtanh.pop %v995
    %v1010 = vrot.slane %v895, 6
    %v1012 = vmul.f32 %v1005, %v1010
    %1014 = vrot.lane.b32.xlu0 %v1008, 64
    %v1015 = vpop.permute.xlu0 %1014
    %v1017 = vmul.f32 %v1005, %v1015
    %1019 = vrot.lane.b32.xlu0 %v1017, 64
    %v1020 = vpop.permute.xlu0 %1019
    %v1022 = vadd.f32 %v1012, %v1020
    %v1023 = vtanh.pop %v1022
    %1025 = vrot.lane.b32.xlu0 %v1023, 64
    %v1026 = vpop.permute.xlu0 %1025
    %v1028 = vmul.f32 %v1007, %v1026
    %v1029 = vmul.f32 %v1028, %v272
    %v1030 = vsel %vm527, %v1029, 0.0
    %1031 = vadd.xlane.f32.xlu0 %v1030
    %v1032 = vpop.xlane.xlu0 %1031
    %vm1033 = vcmp.eq.s32.totalorder %v158, 6
    %v1035 = vrot.slane %v910, 6
    %v1037 = vsel %vm1033, %v1032, %v1035
    %v1038 = vld [vmem:[#allocation2 + $0x10] sm:$0xc0]
    %v1039 = vld [vmem:[#allocation2 + $0x18] sm:$0xc0]
    %v1041 = vrot.slane %v1028, 4
    %v1042 = vsel %vm161, %v1041, 0
    %1044 = vmatprep.subr.mxu0 0.0
    %1045 = vmatpush1.msra.mxu0 0.0
    %1046 = vmatprep.subr.mxu0 0.0
    %1047 = vmatpush1.msra.mxu0 0.0
    %1048 = vmatprep.subr.mxu0 0.0
    %1049 = vmatpush1.msra.mxu0 0.0
    %1050 = vmatprep.subr.mxu0 0.0
    %1051 = vmatpush1.msra.mxu0 0.0
    %1052 = vmatprep.subr.mxu0 0.0
    %1053 = vmatpush1.msra.mxu0 0.0
    %1054 = vmatprep.subr.mxu0 0.0
    %1055 = vmatpush1.msra.mxu0 0.0
    %1056 = vmatprep.subr.mxu0 0.0
    %1057 = vmatpush1.msra.mxu0 0.0
    %1058 = vmatprep.subr.mxu0 0.0
    %1059 = vmatpush1.msra.mxu0 0.0
    %1060 = vmatprep.subr.mxu0 0.0
    %1061 = vmatpush1.msra.mxu0 0.0
    %1062 = vmatprep.subr.mxu0 0.0
    %1063 = vmatpush1.msra.mxu0 0.0
    %1064 = vmatprep.subr.mxu0 0.0
    %1065 = vmatpush1.msra.mxu0 0.0
    %1066 = vmatprep.subr.mxu0 0.0
    %1067 = vmatpush1.msra.mxu0 0.0
    %1068 = vmatprep.subr.mxu0 0.0
    %1069 = vmatpush1.msra.mxu0 0.0
    %1070 = vmatprep.subr.mxu0 0.0
    %1071 = vmatpush1.msra.mxu0 0.0
    %1072 = vmatprep.subr.mxu0 %v155
    %1073 = vmatpush1.msra.mxu0 %v154
    %1074 = vmatprep.subr.mxu0 %v153
    %1075 = vmatpush1.msra.mxu0 %v152
    %1076 = vmatprep.subr.mxu0 0.0
    %1077 = vmatpush2.msra.mxu0 0.0
    %1078 = vmatprep.subr.mxu0 0.0
    %1079 = vmatpush2.msra.mxu0 0.0
    %1080 = vmatprep.subr.mxu0 0.0
    %1081 = vmatpush2.msra.mxu0 0.0
    %1082 = vmatprep.subr.mxu0 0.0
    %1083 = vmatpush2.msra.mxu0 0.0
    %1084 = vmatprep.subr.mxu0 0.0
    %1085 = vmatpush2.msra.mxu0 0.0
    %1086 = vmatprep.subr.mxu0 0.0
    %1087 = vmatpush2.msra.mxu0 0.0
    %1088 = vmatprep.subr.mxu0 0.0
    %1089 = vmatpush2.msra.mxu0 0.0
    %1090 = vmatprep.subr.mxu0 0.0
    %1091 = vmatpush2.msra.mxu0 0.0
    %1092 = vmatprep.subr.mxu0 0.0
    %1093 = vmatpush2.msra.mxu0 0.0
    %1094 = vmatprep.subr.mxu0 0.0
    %1095 = vmatpush2.msra.mxu0 0.0
    %1096 = vmatprep.subr.mxu0 0.0
    %1097 = vmatpush2.msra.mxu0 0.0
    %1098 = vmatprep.subr.mxu0 0.0
    %1099 = vmatpush2.msra.mxu0 0.0
    %1100 = vmatprep.subr.mxu0 0.0
    %1101 = vmatpush2.msra.mxu0 0.0
    %1102 = vmatprep.subr.mxu0 0.0
    %1103 = vmatpush2.msra.mxu0 0.0
    %1104 = vmatprep.subr.mxu0 0.0
    %1105 = vmatpush2.msra.mxu0 0.0
    %1106 = vmatprep.subr.mxu0 0.0
    %1107 = vmatpush2.msra.mxu0 0.0
    %1108 = vmatprep.mubr.f32.mxu0 0.0
    %1109 = vmatmul.mubr.f32.gmra.mxu0 %v1042
    %v1110 = vpop.f32.mrf.mxu0
    %v1111 = vadd.f32 0.0, %v1110
    %v1112 = vpop.f32.mrf.mxu0
    %v1113 = vadd.f32 0.0, %v1112
    %1114 = vdwg.mxu0
    %v1117 = vrot.slane %v1111, 2
    %v1118 = vrot.slane %v1113, 2
    %v1121 = vadd.f32 %v1038, %v1117
    %v1122 = vadd.f32 %v1039, %v1118
    %v1123 = vxor.u32 %v1121, 2147483648
    %v1124 = vxor.u32 %v1122, 2147483648
    %v1125 = vmul.f32 %v1123, 1.442695
    %v1126 = vpow.pop %v1125
    %v1127 = vmul.f32 %v1124, 1.442695
    %v1128 = vpow.pop %v1127
    %v1129 = vadd.f32 %v1126, 1.0
    %v1130 = vadd.f32 %v1128, 1.0
    %v1131 = vrcp.pop %v1129
    %v1132 = vmul.f32 1.0, %v1131
    %v1133 = vrcp.pop %v1130
    %v1134 = vmul.f32 1.0, %v1133
    %v1135 = vtanh.pop %v1122
    %v1137 = vrot.slane %v1022, 6
    %v1139 = vmul.f32 %v1132, %v1137
    %1141 = vrot.lane.b32.xlu0 %v1135, 64
    %v1142 = vpop.permute.xlu0 %1141
    %v1144 = vmul.f32 %v1132, %v1142
    %1146 = vrot.lane.b32.xlu0 %v1144, 64
    %v1147 = vpop.permute.xlu0 %1146
    %v1149 = vadd.f32 %v1139, %v1147
    %v1150 = vtanh.pop %v1149
    %1152 = vrot.lane.b32.xlu0 %v1150, 64
    %v1153 = vpop.permute.xlu0 %1152
    %v1155 = vmul.f32 %v1134, %v1153
    %v1156 = vmul.f32 %v1155, %v272
    %v1157 = vsel %vm655, %v1156, 0.0
    %1158 = vadd.xlane.f32.xlu0 %v1157
    %v1159 = vpop.xlane.xlu0 %1158
    %vm1160 = vcmp.eq.s32.totalorder %v158, 7
    %v1162 = vrot.slane %v1037, 6
    %v1164 = vsel %vm1160, %v1159, %v1162
    %s1165 = sld [smem:[#allocation3]]
    %v1166 = vstv %s1165
    %v1167 = vadd.f32 %v1164, %v1166
    %v1168 = vxor.u32 %v1167, 2147483648
    %v1169 = vmul.f32 %v1168, 1.442695
    %v1170 = vpow.pop %v1169
    %v1171 = vadd.f32 %v1170, 1.0
    %v1172 = vrcp.pop %v1171
    %v1173 = vmul.f32 1.0, %v1172
    %vm1174 = vcmask 64518
    %1175 = vst.msk [vmem:[#allocation7 - $0x6] sm:$0xc0] %vm1174, %v1173
    // Predicated region
    $region30: #{lstm_network_forward.1} parent=1 // pred_check
      _
    $region31: #{lstm_network_forward.1} parent=1 // pred_check_branch
      %1177 = sbr.rel (0) target = $region33
    $region32: #{lstm_network_forward.1} parent=1 // pred_region
      %s1179 = ssub.s32 32, 32
      %1180 = vsyncadd [#allocation6], %s1179
      %s1182 = sshll.u32 [#allocation7], 4
      %s1183 = int_to_ptr.vmem [resolvable:$true] %s1182
      %1185 = dma.vmem_to_hbm [thread:$0]  %s1183, 32, %s6, [#allocation6]
    $region33: #{lstm_network_forward.1} parent=1 // pred_fallthru
      _
    // Predicated region
    $region34: #{lstm_network_forward.1} parent=1 // pred_check
      _
    $region35: #{lstm_network_forward.1} parent=1 // pred_check_branch
      %1187 = sbr.rel (0) target = $region37
    $region36: #{lstm_network_forward.1} parent=1 // pred_region
      %1188 = dma.done [#allocation6], 32
    $region37: #{lstm_network_forward.1} parent=1 // pred_fallthru
      _
    %1189 = vsyncpa [#allocation5], 1
    %1190 = vsyncpa [#allocation6], 1

</llo_original>
